<compile_context>
chip_gen: v7x
topology: tpu7x:2x2x1
jax: 0.10.0
libtpu: 0.0.40
codegen_flags: <defaults>
</compile_context>

<pallas_src>
import functools

import jax
import jax.numpy as jnp
from jax.experimental import pallas as pl
from jax.experimental.pallas import tpu as pltpu


def _spatial_attention_kernel(w_ref, x_ref, o_ref, pm_ref, *, ksize, pad, H, W):
    # w_ref : SMEM (2*k*k,) f32      conv weights; avg branch pre-scaled by 1/C
    # x_ref : VMEM (B_n, C, H*W)     input block, spatially flattened (lane-dense)
    # o_ref : VMEM (B_n, 1, H*Wp)    width-padded flat attention map (wrapper drops pad cols)
    # pm_ref: VMEM (2, Hp*Wp + k-1)  zero-framed, width-padded flat (sum, max) maps
    B_n, C, HW = x_ref.shape
    Wp = W + 2 * pad
    n_out = H * Wp
    CC = min(C, 32)            # channel chunk -> dense (CC, HW) vregs
    nfull = C // CC
    tail = C - nfull * CC

    # Zero the frame + slack once per grid step; the interior row segments are
    # fully rewritten for every batch element below, so the frame stays zero.
    pm_ref[...] = jnp.zeros_like(pm_ref)

    for b in range(B_n):  # static unroll, B_n <= 8
        # ---- fused single-pass channel sum + max (one read of the block) -------
        def reduce_chunk(c0, acc_s, acc_m):
            chunk = x_ref[b, pl.ds(c0, CC), :].astype(jnp.float32)   # (CC, HW)
            return acc_s + chunk, jnp.maximum(acc_m, chunk)

        acc_s = jnp.zeros((CC, HW), jnp.float32)
        acc_m = jnp.full((CC, HW), -jnp.inf, jnp.float32)
        if nfull == 1:
            acc_s, acc_m = reduce_chunk(0, acc_s, acc_m)
        else:
            def body(i, carry):
                c0 = pl.multiple_of(i * CC, CC)
                return reduce_chunk(c0, *carry)
            acc_s, acc_m = jax.lax.fori_loop(0, nfull, body, (acc_s, acc_m))

        s = acc_s.sum(axis=0)          # channel sum (1/C folded into avg weights)
        m = acc_m.max(axis=0)          # channel max
        if tail:
            tchunk = x_ref[b, pl.ds(nfull * CC, tail), :].astype(jnp.float32)
            s = s + tchunk.sum(axis=0)
            m = jnp.maximum(m, tchunk.max(axis=0))

        # ---- scatter reduced rows into the zero-framed, width-padded flat maps --
        for h in range(H):
            lo = h * W
            dst0 = (pad + h) * Wp + pad
            pm_ref[0, pl.ds(dst0, W)] = s[lo:lo + W]
            pm_ref[1, pl.ds(dst0, W)] = m[lo:lo + W]

        # ---- 2*k*k-tap cross-correlation as uniformly shifted flat loads --------
        # out[h*Wp + w] = sum_{c,kh,kw} wt[c,kh,kw] * pm[c, (h+kh)*Wp + (w+kw)]
        # valid for w < W; the Wp-W trailing columns per row are sliced off by the
        # wrapper.  All taps are in-bounds thanks to the (k-1)-lane zero slack.
        acc = jnp.zeros((n_out,), jnp.float32)
        for c in range(2):
            for kh in range(ksize):
                for kw in range(ksize):
                    wgt = w_ref[(c * ksize + kh) * ksize + kw]        # SMEM scalar
                    acc = acc + wgt * pm_ref[c, pl.ds(kh * Wp + kw, n_out)]
        o_ref[b, 0, :] = jax.nn.sigmoid(acc).astype(o_ref.dtype)


def _pick_batch_block(N, per_elem_bytes):
    """Batch elements per grid step: amortize per-step overhead, but keep >= 2
    grid steps when N >= 2 (v7x has 2 TensorCores) and cap the static unroll."""
    cap = min(8, max(1, (1 << 20) // max(per_elem_bytes, 1)))
    if N >= 2:
        cap = min(cap, N // 2)
    cap = max(cap, 1)
    bn = 1
    for d in range(1, cap + 1):
        if N % d == 0:
            bn = d
    return bn


def spatial_attention(x, weight, kernel_size=7):
    assert kernel_size in (3, 7), "kernel size must be 3 or 7"
    pad = 3 if kernel_size == 7 else 1
    N, C, H, W = x.shape
    Hp, Wp = H + 2 * pad, W + 2 * pad
    HW = H * W

    # Fold 1/C into the avg-branch weights: conv(avg) == conv_scaled(sum).
    w = weight.reshape(2, kernel_size, kernel_size).astype(jnp.float32)
    w = w.at[0].multiply(1.0 / C)
    w_flat = w.reshape(-1)                                   # (2*k*k,)

    x_flat = x.reshape(N, C, HW)                             # free (contiguous dims)

    per_elem_bytes = C * HW * x.dtype.itemsize
    B_n = _pick_batch_block(N, per_elem_bytes)
    grid = (N // B_n,)

    kernel = functools.partial(_spatial_attention_kernel,
                               ksize=kernel_size, pad=pad, H=H, W=W)
    out_p = pl.pallas_call(
        kernel,
        out_shape=jax.ShapeDtypeStruct((N, 1, H * Wp), x.dtype),
        grid=grid,
        in_specs=[
            pl.BlockSpec(memory_space=pltpu.MemorySpace.SMEM),        # conv weights
            pl.BlockSpec((B_n, C, HW), lambda n: (n, 0, 0)),          # input block
        ],
        out_specs=pl.BlockSpec((B_n, 1, H * Wp), lambda n: (n, 0, 0)),
        scratch_shapes=[
            pltpu.VMEM((2, Hp * Wp + kernel_size - 1), jnp.float32),  # padded flat maps
        ],
        compiler_params=pltpu.CompilerParams(
            dimension_semantics=("parallel",)),
    )(w_flat, x_flat)

    # Drop the Wp-W garbage columns produced by the width-padded flat conv.
    return out_p.reshape(N, 1, H, Wp)[:, :, :, :W]


def _reference(x, weight, kernel_size=7):
    # Pure-JAX reference mirroring the PyTorch forward.
    pad = 3 if kernel_size == 7 else 1
    avg = jnp.mean(x, axis=1, keepdims=True)
    mx = jnp.max(x, axis=1, keepdims=True)
    cat = jnp.concatenate([avg, mx], axis=1)
    out = jax.lax.conv_general_dilated(
        cat, weight, window_strides=(1, 1),
        padding=[(pad, pad), (pad, pad)],
        dimension_numbers=("NCHW", "OIHW", "NCHW"))
    return jax.nn.sigmoid(out)


if __name__ == "__main__":
    key = jax.random.PRNGKey(0)
    kx, kw = jax.random.split(key)

    N, C, H, W = 2, 4, 16, 16
    ksize = 7
    x = jax.random.normal(kx, (N, C, H, W), dtype=jnp.float32)

    # Deterministic conv weight init (kaiming-uniform-like bound), shape (1, 2, k, k), no bias.
    fan_in = 2 * ksize * ksize
    bound = (1.0 / fan_in) ** 0.5
    weight = jax.random.uniform(kw, (1, 2, ksize, ksize), jnp.float32, -bound, bound)

    out = jax.block_until_ready(spatial_attention(x, weight, ksize))
    ref = _reference(x, weight, ksize)

    assert out.shape == (N, 1, H, W), out.shape
    assert jnp.allclose(out, ref, atol=1e-5, rtol=1e-5), float(jnp.max(jnp.abs(out - ref)))
    print("KERNEL_OK")
</pallas_src>

<mosaic_0001>
module attributes {stable_mosaic.version = 11 : i64} {
  func.func @_spatial_attention_kernel(%arg0: i32, %arg1: memref<98xf32, #tpu.memory_space<smem>>, %arg2: memref<1x4x256xf32, #tpu.memory_space<vmem>>, %arg3: memref<1x1x352xf32, #tpu.memory_space<vmem>>, %arg4: memref<2x490xf32, #tpu.memory_space<vmem>>) attributes {dimension_semantics = [#tpu.dimension_semantics<parallel>], iteration_bounds = array<i64: 2>, scalar_prefetch = 0 : i64, scratch_operands = 1 : i64, tpu.core_type = #tpu.core_type<tc>, window_params = [{transform_indices = @transform_0, window_bounds = array<i64: 98>}, {transform_indices = @transform_1, window_bounds = array<i64: 1, 4, 256>}, {transform_indices = @transform_2, window_bounds = array<i64: 1, 1, 352>}]} {
    %cst = arith.constant 0.000000e+00 : f32
    %0 = vector.broadcast %cst : f32 to vector<2x490xf32>
    %c0 = arith.constant 0 : index
    %c0_0 = arith.constant 0 : index
    %1 = vector.load %arg4[%c0, %c0_0] : memref<2x490xf32, #tpu.memory_space<vmem>>, vector<2x490xf32>
    tpu.vector_store %arg4[%c0, %c0_0], %0 {strides = array<i32>} : memref<2x490xf32, #tpu.memory_space<vmem>>, vector<2x490xf32>,
    %cst_1 = arith.constant 0.000000e+00 : f32
    %2 = vector.broadcast %cst_1 : f32 to vector<4x256xf32>
    %cst_2 = arith.constant 0xFF800000 : f32
    %3 = vector.broadcast %cst_2 : f32 to vector<4x256xf32>
    %c0_3 = arith.constant 0 : index
    %c0_4 = arith.constant 0 : index
    %c0_5 = arith.constant 0 : index
    %4 = vector.load %arg2[%c0_3, %c0_4, %c0_5] : memref<1x4x256xf32, #tpu.memory_space<vmem>>, vector<1x4x256xf32>
    %5 = vector.shape_cast %4 : vector<1x4x256xf32> to vector<4x256xf32>
    %6 = arith.addf %2, %5 : vector<4x256xf32>
    %7 = arith.maximumf %3, %5 : vector<4x256xf32>
    %cst_6 = arith.constant dense<0.000000e+00> : vector<256xf32>
    %8 = vector.multi_reduction <add>, %6, %cst_6 [0] : vector<4x256xf32> to vector<256xf32>
    %cst_7 = arith.constant dense<0xFF800000> : vector<256xf32>
    %9 = vector.multi_reduction <maximumf>, %7, %cst_7 [0] : vector<4x256xf32> to vector<256xf32>
    %10 = vector.extract_strided_slice %8 {offsets = [0], sizes = [16], strides = [1]} : vector<256xf32> to vector<16xf32>
    %c0_8 = arith.constant 0 : index
    %c69 = arith.constant 69 : index
    %11 = vector.load %arg4[%c0_8, %c69] : memref<2x490xf32, #tpu.memory_space<vmem>>, vector<1x16xf32>
    %12 = vector.shape_cast %11 : vector<1x16xf32> to vector<16xf32>
    %13 = vector.shape_cast %10 : vector<16xf32> to vector<1x16xf32>
    tpu.vector_store %arg4[%c0_8, %c69], %13 {strides = array<i32>} : memref<2x490xf32, #tpu.memory_space<vmem>>, vector<1x16xf32>,
    %14 = vector.extract_strided_slice %9 {offsets = [0], sizes = [16], strides = [1]} : vector<256xf32> to vector<16xf32>
    %c1 = arith.constant 1 : index
    %c69_9 = arith.constant 69 : index
    %15 = vector.load %arg4[%c1, %c69_9] : memref<2x490xf32, #tpu.memory_space<vmem>>, vector<1x16xf32>
    %16 = vector.shape_cast %15 : vector<1x16xf32> to vector<16xf32>
    %17 = vector.shape_cast %14 : vector<16xf32> to vector<1x16xf32>
    tpu.vector_store %arg4[%c1, %c69_9], %17 {strides = array<i32>} : memref<2x490xf32, #tpu.memory_space<vmem>>, vector<1x16xf32>,
    %18 = vector.extract_strided_slice %8 {offsets = [16], sizes = [16], strides = [1]} : vector<256xf32> to vector<16xf32>
    %c0_10 = arith.constant 0 : index
    %c91 = arith.constant 91 : index
    %19 = vector.load %arg4[%c0_10, %c91] : memref<2x490xf32, #tpu.memory_space<vmem>>, vector<1x16xf32>
    %20 = vector.shape_cast %19 : vector<1x16xf32> to vector<16xf32>
    %21 = vector.shape_cast %18 : vector<16xf32> to vector<1x16xf32>
    tpu.vector_store %arg4[%c0_10, %c91], %21 {strides = array<i32>} : memref<2x490xf32, #tpu.memory_space<vmem>>, vector<1x16xf32>,
    %22 = vector.extract_strided_slice %9 {offsets = [16], sizes = [16], strides = [1]} : vector<256xf32> to vector<16xf32>
    %c1_11 = arith.constant 1 : index
    %c91_12 = arith.constant 91 : index
    %23 = vector.load %arg4[%c1_11, %c91_12] : memref<2x490xf32, #tpu.memory_space<vmem>>, vector<1x16xf32>
    %24 = vector.shape_cast %23 : vector<1x16xf32> to vector<16xf32>
    %25 = vector.shape_cast %22 : vector<16xf32> to vector<1x16xf32>
    tpu.vector_store %arg4[%c1_11, %c91_12], %25 {strides = array<i32>} : memref<2x490xf32, #tpu.memory_space<vmem>>, vector<1x16xf32>,
    %26 = vector.extract_strided_slice %8 {offsets = [32], sizes = [16], strides = [1]} : vector<256xf32> to vector<16xf32>
    %c0_13 = arith.constant 0 : index
    %c113 = arith.constant 113 : index
    %27 = vector.load %arg4[%c0_13, %c113] : memref<2x490xf32, #tpu.memory_space<vmem>>, vector<1x16xf32>
    %28 = vector.shape_cast %27 : vector<1x16xf32> to vector<16xf32>
    %29 = vector.shape_cast %26 : vector<16xf32> to vector<1x16xf32>
    tpu.vector_store %arg4[%c0_13, %c113], %29 {strides = array<i32>} : memref<2x490xf32, #tpu.memory_space<vmem>>, vector<1x16xf32>,
    %30 = vector.extract_strided_slice %9 {offsets = [32], sizes = [16], strides = [1]} : vector<256xf32> to vector<16xf32>
    %c1_14 = arith.constant 1 : index
    %c113_15 = arith.constant 113 : index
    %31 = vector.load %arg4[%c1_14, %c113_15] : memref<2x490xf32, #tpu.memory_space<vmem>>, vector<1x16xf32>
    %32 = vector.shape_cast %31 : vector<1x16xf32> to vector<16xf32>
    %33 = vector.shape_cast %30 : vector<16xf32> to vector<1x16xf32>
    tpu.vector_store %arg4[%c1_14, %c113_15], %33 {strides = array<i32>} : memref<2x490xf32, #tpu.memory_space<vmem>>, vector<1x16xf32>,
    %34 = vector.extract_strided_slice %8 {offsets = [48], sizes = [16], strides = [1]} : vector<256xf32> to vector<16xf32>
    %c0_16 = arith.constant 0 : index
    %c135 = arith.constant 135 : index
    %35 = vector.load %arg4[%c0_16, %c135] : memref<2x490xf32, #tpu.memory_space<vmem>>, vector<1x16xf32>
    %36 = vector.shape_cast %35 : vector<1x16xf32> to vector<16xf32>
    %37 = vector.shape_cast %34 : vector<16xf32> to vector<1x16xf32>
    tpu.vector_store %arg4[%c0_16, %c135], %37 {strides = array<i32>} : memref<2x490xf32, #tpu.memory_space<vmem>>, vector<1x16xf32>,
    %38 = vector.extract_strided_slice %9 {offsets = [48], sizes = [16], strides = [1]} : vector<256xf32> to vector<16xf32>
    %c1_17 = arith.constant 1 : index
    %c135_18 = arith.constant 135 : index
    %39 = vector.load %arg4[%c1_17, %c135_18] : memref<2x490xf32, #tpu.memory_space<vmem>>, vector<1x16xf32>
    %40 = vector.shape_cast %39 : vector<1x16xf32> to vector<16xf32>
    %41 = vector.shape_cast %38 : vector<16xf32> to vector<1x16xf32>
    tpu.vector_store %arg4[%c1_17, %c135_18], %41 {strides = array<i32>} : memref<2x490xf32, #tpu.memory_space<vmem>>, vector<1x16xf32>,
    %42 = vector.extract_strided_slice %8 {offsets = [64], sizes = [16], strides = [1]} : vector<256xf32> to vector<16xf32>
    %c0_19 = arith.constant 0 : index
    %c157 = arith.constant 157 : index
    %43 = vector.load %arg4[%c0_19, %c157] : memref<2x490xf32, #tpu.memory_space<vmem>>, vector<1x16xf32>
    %44 = vector.shape_cast %43 : vector<1x16xf32> to vector<16xf32>
    %45 = vector.shape_cast %42 : vector<16xf32> to vector<1x16xf32>
    tpu.vector_store %arg4[%c0_19, %c157], %45 {strides = array<i32>} : memref<2x490xf32, #tpu.memory_space<vmem>>, vector<1x16xf32>,
    %46 = vector.extract_strided_slice %9 {offsets = [64], sizes = [16], strides = [1]} : vector<256xf32> to vector<16xf32>
    %c1_20 = arith.constant 1 : index
    %c157_21 = arith.constant 157 : index
    %47 = vector.load %arg4[%c1_20, %c157_21] : memref<2x490xf32, #tpu.memory_space<vmem>>, vector<1x16xf32>
    %48 = vector.shape_cast %47 : vector<1x16xf32> to vector<16xf32>
    %49 = vector.shape_cast %46 : vector<16xf32> to vector<1x16xf32>
    tpu.vector_store %arg4[%c1_20, %c157_21], %49 {strides = array<i32>} : memref<2x490xf32, #tpu.memory_space<vmem>>, vector<1x16xf32>,
    %50 = vector.extract_strided_slice %8 {offsets = [80], sizes = [16], strides = [1]} : vector<256xf32> to vector<16xf32>
    %c0_22 = arith.constant 0 : index
    %c179 = arith.constant 179 : index
    %51 = vector.load %arg4[%c0_22, %c179] : memref<2x490xf32, #tpu.memory_space<vmem>>, vector<1x16xf32>
    %52 = vector.shape_cast %51 : vector<1x16xf32> to vector<16xf32>
    %53 = vector.shape_cast %50 : vector<16xf32> to vector<1x16xf32>
    tpu.vector_store %arg4[%c0_22, %c179], %53 {strides = array<i32>} : memref<2x490xf32, #tpu.memory_space<vmem>>, vector<1x16xf32>,
    %54 = vector.extract_strided_slice %9 {offsets = [80], sizes = [16], strides = [1]} : vector<256xf32> to vector<16xf32>
    %c1_23 = arith.constant 1 : index
    %c179_24 = arith.constant 179 : index
    %55 = vector.load %arg4[%c1_23, %c179_24] : memref<2x490xf32, #tpu.memory_space<vmem>>, vector<1x16xf32>
    %56 = vector.shape_cast %55 : vector<1x16xf32> to vector<16xf32>
    %57 = vector.shape_cast %54 : vector<16xf32> to vector<1x16xf32>
    tpu.vector_store %arg4[%c1_23, %c179_24], %57 {strides = array<i32>} : memref<2x490xf32, #tpu.memory_space<vmem>>, vector<1x16xf32>,
    %58 = vector.extract_strided_slice %8 {offsets = [96], sizes = [16], strides = [1]} : vector<256xf32> to vector<16xf32>
    %c0_25 = arith.constant 0 : index
    %c201 = arith.constant 201 : index
    %59 = vector.load %arg4[%c0_25, %c201] : memref<2x490xf32, #tpu.memory_space<vmem>>, vector<1x16xf32>
    %60 = vector.shape_cast %59 : vector<1x16xf32> to vector<16xf32>
    %61 = vector.shape_cast %58 : vector<16xf32> to vector<1x16xf32>
    tpu.vector_store %arg4[%c0_25, %c201], %61 {strides = array<i32>} : memref<2x490xf32, #tpu.memory_space<vmem>>, vector<1x16xf32>,
    %62 = vector.extract_strided_slice %9 {offsets = [96], sizes = [16], strides = [1]} : vector<256xf32> to vector<16xf32>
    %c1_26 = arith.constant 1 : index
    %c201_27 = arith.constant 201 : index
    %63 = vector.load %arg4[%c1_26, %c201_27] : memref<2x490xf32, #tpu.memory_space<vmem>>, vector<1x16xf32>
    %64 = vector.shape_cast %63 : vector<1x16xf32> to vector<16xf32>
    %65 = vector.shape_cast %62 : vector<16xf32> to vector<1x16xf32>
    tpu.vector_store %arg4[%c1_26, %c201_27], %65 {strides = array<i32>} : memref<2x490xf32, #tpu.memory_space<vmem>>, vector<1x16xf32>,
    %66 = vector.extract_strided_slice %8 {offsets = [112], sizes = [16], strides = [1]} : vector<256xf32> to vector<16xf32>
    %c0_28 = arith.constant 0 : index
    %c223 = arith.constant 223 : index
    %67 = vector.load %arg4[%c0_28, %c223] : memref<2x490xf32, #tpu.memory_space<vmem>>, vector<1x16xf32>
    %68 = vector.shape_cast %67 : vector<1x16xf32> to vector<16xf32>
    %69 = vector.shape_cast %66 : vector<16xf32> to vector<1x16xf32>
    tpu.vector_store %arg4[%c0_28, %c223], %69 {strides = array<i32>} : memref<2x490xf32, #tpu.memory_space<vmem>>, vector<1x16xf32>,
    %70 = vector.extract_strided_slice %9 {offsets = [112], sizes = [16], strides = [1]} : vector<256xf32> to vector<16xf32>
    %c1_29 = arith.constant 1 : index
    %c223_30 = arith.constant 223 : index
    %71 = vector.load %arg4[%c1_29, %c223_30] : memref<2x490xf32, #tpu.memory_space<vmem>>, vector<1x16xf32>
    %72 = vector.shape_cast %71 : vector<1x16xf32> to vector<16xf32>
    %73 = vector.shape_cast %70 : vector<16xf32> to vector<1x16xf32>
    tpu.vector_store %arg4[%c1_29, %c223_30], %73 {strides = array<i32>} : memref<2x490xf32, #tpu.memory_space<vmem>>, vector<1x16xf32>,
    %74 = vector.extract_strided_slice %8 {offsets = [128], sizes = [16], strides = [1]} : vector<256xf32> to vector<16xf32>
    %c0_31 = arith.constant 0 : index
    %c245 = arith.constant 245 : index
    %75 = vector.load %arg4[%c0_31, %c245] : memref<2x490xf32, #tpu.memory_space<vmem>>, vector<1x16xf32>
    %76 = vector.shape_cast %75 : vector<1x16xf32> to vector<16xf32>
    %77 = vector.shape_cast %74 : vector<16xf32> to vector<1x16xf32>
    tpu.vector_store %arg4[%c0_31, %c245], %77 {strides = array<i32>} : memref<2x490xf32, #tpu.memory_space<vmem>>, vector<1x16xf32>,
    %78 = vector.extract_strided_slice %9 {offsets = [128], sizes = [16], strides = [1]} : vector<256xf32> to vector<16xf32>
    %c1_32 = arith.constant 1 : index
    %c245_33 = arith.constant 245 : index
    %79 = vector.load %arg4[%c1_32, %c245_33] : memref<2x490xf32, #tpu.memory_space<vmem>>, vector<1x16xf32>
    %80 = vector.shape_cast %79 : vector<1x16xf32> to vector<16xf32>
    %81 = vector.shape_cast %78 : vector<16xf32> to vector<1x16xf32>
    tpu.vector_store %arg4[%c1_32, %c245_33], %81 {strides = array<i32>} : memref<2x490xf32, #tpu.memory_space<vmem>>, vector<1x16xf32>,
    %82 = vector.extract_strided_slice %8 {offsets = [144], sizes = [16], strides = [1]} : vector<256xf32> to vector<16xf32>
    %c0_34 = arith.constant 0 : index
    %c267 = arith.constant 267 : index
    %83 = vector.load %arg4[%c0_34, %c267] : memref<2x490xf32, #tpu.memory_space<vmem>>, vector<1x16xf32>
    %84 = vector.shape_cast %83 : vector<1x16xf32> to vector<16xf32>
    %85 = vector.shape_cast %82 : vector<16xf32> to vector<1x16xf32>
    tpu.vector_store %arg4[%c0_34, %c267], %85 {strides = array<i32>} : memref<2x490xf32, #tpu.memory_space<vmem>>, vector<1x16xf32>,
    %86 = vector.extract_strided_slice %9 {offsets = [144], sizes = [16], strides = [1]} : vector<256xf32> to vector<16xf32>
    %c1_35 = arith.constant 1 : index
    %c267_36 = arith.constant 267 : index
    %87 = vector.load %arg4[%c1_35, %c267_36] : memref<2x490xf32, #tpu.memory_space<vmem>>, vector<1x16xf32>
    %88 = vector.shape_cast %87 : vector<1x16xf32> to vector<16xf32>
    %89 = vector.shape_cast %86 : vector<16xf32> to vector<1x16xf32>
    tpu.vector_store %arg4[%c1_35, %c267_36], %89 {strides = array<i32>} : memref<2x490xf32, #tpu.memory_space<vmem>>, vector<1x16xf32>,
    %90 = vector.extract_strided_slice %8 {offsets = [160], sizes = [16], strides = [1]} : vector<256xf32> to vector<16xf32>
    %c0_37 = arith.constant 0 : index
    %c289 = arith.constant 289 : index
    %91 = vector.load %arg4[%c0_37, %c289] : memref<2x490xf32, #tpu.memory_space<vmem>>, vector<1x16xf32>
    %92 = vector.shape_cast %91 : vector<1x16xf32> to vector<16xf32>
    %93 = vector.shape_cast %90 : vector<16xf32> to vector<1x16xf32>
    tpu.vector_store %arg4[%c0_37, %c289], %93 {strides = array<i32>} : memref<2x490xf32, #tpu.memory_space<vmem>>, vector<1x16xf32>,
    %94 = vector.extract_strided_slice %9 {offsets = [160], sizes = [16], strides = [1]} : vector<256xf32> to vector<16xf32>
    %c1_38 = arith.constant 1 : index
    %c289_39 = arith.constant 289 : index
    %95 = vector.load %arg4[%c1_38, %c289_39] : memref<2x490xf32, #tpu.memory_space<vmem>>, vector<1x16xf32>
    %96 = vector.shape_cast %95 : vector<1x16xf32> to vector<16xf32>
    %97 = vector.shape_cast %94 : vector<16xf32> to vector<1x16xf32>
    tpu.vector_store %arg4[%c1_38, %c289_39], %97 {strides = array<i32>} : memref<2x490xf32, #tpu.memory_space<vmem>>, vector<1x16xf32>,
    %98 = vector.extract_strided_slice %8 {offsets = [176], sizes = [16], strides = [1]} : vector<256xf32> to vector<16xf32>
    %c0_40 = arith.constant 0 : index
    %c311 = arith.constant 311 : index
    %99 = vector.load %arg4[%c0_40, %c311] : memref<2x490xf32, #tpu.memory_space<vmem>>, vector<1x16xf32>
    %100 = vector.shape_cast %99 : vector<1x16xf32> to vector<16xf32>
    %101 = vector.shape_cast %98 : vector<16xf32> to vector<1x16xf32>
    tpu.vector_store %arg4[%c0_40, %c311], %101 {strides = array<i32>} : memref<2x490xf32, #tpu.memory_space<vmem>>, vector<1x16xf32>,
    %102 = vector.extract_strided_slice %9 {offsets = [176], sizes = [16], strides = [1]} : vector<256xf32> to vector<16xf32>
    %c1_41 = arith.constant 1 : index
    %c311_42 = arith.constant 311 : index
    %103 = vector.load %arg4[%c1_41, %c311_42] : memref<2x490xf32, #tpu.memory_space<vmem>>, vector<1x16xf32>
    %104 = vector.shape_cast %103 : vector<1x16xf32> to vector<16xf32>
    %105 = vector.shape_cast %102 : vector<16xf32> to vector<1x16xf32>
    tpu.vector_store %arg4[%c1_41, %c311_42], %105 {strides = array<i32>} : memref<2x490xf32, #tpu.memory_space<vmem>>, vector<1x16xf32>,
    %106 = vector.extract_strided_slice %8 {offsets = [192], sizes = [16], strides = [1]} : vector<256xf32> to vector<16xf32>
    %c0_43 = arith.constant 0 : index
    %c333 = arith.constant 333 : index
    %107 = vector.load %arg4[%c0_43, %c333] : memref<2x490xf32, #tpu.memory_space<vmem>>, vector<1x16xf32>
    %108 = vector.shape_cast %107 : vector<1x16xf32> to vector<16xf32>
    %109 = vector.shape_cast %106 : vector<16xf32> to vector<1x16xf32>
    tpu.vector_store %arg4[%c0_43, %c333], %109 {strides = array<i32>} : memref<2x490xf32, #tpu.memory_space<vmem>>, vector<1x16xf32>,
    %110 = vector.extract_strided_slice %9 {offsets = [192], sizes = [16], strides = [1]} : vector<256xf32> to vector<16xf32>
    %c1_44 = arith.constant 1 : index
    %c333_45 = arith.constant 333 : index
    %111 = vector.load %arg4[%c1_44, %c333_45] : memref<2x490xf32, #tpu.memory_space<vmem>>, vector<1x16xf32>
    %112 = vector.shape_cast %111 : vector<1x16xf32> to vector<16xf32>
    %113 = vector.shape_cast %110 : vector<16xf32> to vector<1x16xf32>
    tpu.vector_store %arg4[%c1_44, %c333_45], %113 {strides = array<i32>} : memref<2x490xf32, #tpu.memory_space<vmem>>, vector<1x16xf32>,
    %114 = vector.extract_strided_slice %8 {offsets = [208], sizes = [16], strides = [1]} : vector<256xf32> to vector<16xf32>
    %c0_46 = arith.constant 0 : index
    %c355 = arith.constant 355 : index
    %115 = vector.load %arg4[%c0_46, %c355] : memref<2x490xf32, #tpu.memory_space<vmem>>, vector<1x16xf32>
    %116 = vector.shape_cast %115 : vector<1x16xf32> to vector<16xf32>
    %117 = vector.shape_cast %114 : vector<16xf32> to vector<1x16xf32>
    tpu.vector_store %arg4[%c0_46, %c355], %117 {strides = array<i32>} : memref<2x490xf32, #tpu.memory_space<vmem>>, vector<1x16xf32>,
    %118 = vector.extract_strided_slice %9 {offsets = [208], sizes = [16], strides = [1]} : vector<256xf32> to vector<16xf32>
    %c1_47 = arith.constant 1 : index
    %c355_48 = arith.constant 355 : index
    %119 = vector.load %arg4[%c1_47, %c355_48] : memref<2x490xf32, #tpu.memory_space<vmem>>, vector<1x16xf32>
    %120 = vector.shape_cast %119 : vector<1x16xf32> to vector<16xf32>
    %121 = vector.shape_cast %118 : vector<16xf32> to vector<1x16xf32>
    tpu.vector_store %arg4[%c1_47, %c355_48], %121 {strides = array<i32>} : memref<2x490xf32, #tpu.memory_space<vmem>>, vector<1x16xf32>,
    %122 = vector.extract_strided_slice %8 {offsets = [224], sizes = [16], strides = [1]} : vector<256xf32> to vector<16xf32>
    %c0_49 = arith.constant 0 : index
    %c377 = arith.constant 377 : index
    %123 = vector.load %arg4[%c0_49, %c377] : memref<2x490xf32, #tpu.memory_space<vmem>>, vector<1x16xf32>
    %124 = vector.shape_cast %123 : vector<1x16xf32> to vector<16xf32>
    %125 = vector.shape_cast %122 : vector<16xf32> to vector<1x16xf32>
    tpu.vector_store %arg4[%c0_49, %c377], %125 {strides = array<i32>} : memref<2x490xf32, #tpu.memory_space<vmem>>, vector<1x16xf32>,
    %126 = vector.extract_strided_slice %9 {offsets = [224], sizes = [16], strides = [1]} : vector<256xf32> to vector<16xf32>
    %c1_50 = arith.constant 1 : index
    %c377_51 = arith.constant 377 : index
    %127 = vector.load %arg4[%c1_50, %c377_51] : memref<2x490xf32, #tpu.memory_space<vmem>>, vector<1x16xf32>
    %128 = vector.shape_cast %127 : vector<1x16xf32> to vector<16xf32>
    %129 = vector.shape_cast %126 : vector<16xf32> to vector<1x16xf32>
    tpu.vector_store %arg4[%c1_50, %c377_51], %129 {strides = array<i32>} : memref<2x490xf32, #tpu.memory_space<vmem>>, vector<1x16xf32>,
    %130 = vector.extract_strided_slice %8 {offsets = [240], sizes = [16], strides = [1]} : vector<256xf32> to vector<16xf32>
    %c0_52 = arith.constant 0 : index
    %c399 = arith.constant 399 : index
    %131 = vector.load %arg4[%c0_52, %c399] : memref<2x490xf32, #tpu.memory_space<vmem>>, vector<1x16xf32>
    %132 = vector.shape_cast %131 : vector<1x16xf32> to vector<16xf32>
    %133 = vector.shape_cast %130 : vector<16xf32> to vector<1x16xf32>
    tpu.vector_store %arg4[%c0_52, %c399], %133 {strides = array<i32>} : memref<2x490xf32, #tpu.memory_space<vmem>>, vector<1x16xf32>,
    %134 = vector.extract_strided_slice %9 {offsets = [240], sizes = [16], strides = [1]} : vector<256xf32> to vector<16xf32>
    %c1_53 = arith.constant 1 : index
    %c399_54 = arith.constant 399 : index
    %135 = vector.load %arg4[%c1_53, %c399_54] : memref<2x490xf32, #tpu.memory_space<vmem>>, vector<1x16xf32>
    %136 = vector.shape_cast %135 : vector<1x16xf32> to vector<16xf32>
    %137 = vector.shape_cast %134 : vector<16xf32> to vector<1x16xf32>
    tpu.vector_store %arg4[%c1_53, %c399_54], %137 {strides = array<i32>} : memref<2x490xf32, #tpu.memory_space<vmem>>, vector<1x16xf32>,
    %cst_55 = arith.constant 0.000000e+00 : f32
    %138 = vector.broadcast %cst_55 : f32 to vector<352xf32>
    %c0_56 = arith.constant 0 : index
    %139 = memref.load %arg1[%c0_56] : memref<98xf32, #tpu.memory_space<smem>>
    %c0_57 = arith.constant 0 : index
    %c0_58 = arith.constant 0 : index
    %140 = vector.load %arg4[%c0_57, %c0_58] : memref<2x490xf32, #tpu.memory_space<vmem>>, vector<1x352xf32>
    %141 = vector.shape_cast %140 : vector<1x352xf32> to vector<352xf32>
    %142 = vector.broadcast %139 : f32 to vector<352xf32>
    %143 = arith.mulf %142, %141 : vector<352xf32>
    %144 = arith.addf %138, %143 : vector<352xf32>
    %c1_59 = arith.constant 1 : index
    %145 = memref.load %arg1[%c1_59] : memref<98xf32, #tpu.memory_space<smem>>
    %c0_60 = arith.constant 0 : index
    %c1_61 = arith.constant 1 : index
    %146 = vector.load %arg4[%c0_60, %c1_61] : memref<2x490xf32, #tpu.memory_space<vmem>>, vector<1x352xf32>
    %147 = vector.shape_cast %146 : vector<1x352xf32> to vector<352xf32>
    %148 = vector.broadcast %145 : f32 to vector<352xf32>
    %149 = arith.mulf %148, %147 : vector<352xf32>
    %150 = arith.addf %144, %149 : vector<352xf32>
    %c2 = arith.constant 2 : index
    %151 = memref.load %arg1[%c2] : memref<98xf32, #tpu.memory_space<smem>>
    %c0_62 = arith.constant 0 : index
    %c2_63 = arith.constant 2 : index
    %152 = vector.load %arg4[%c0_62, %c2_63] : memref<2x490xf32, #tpu.memory_space<vmem>>, vector<1x352xf32>
    %153 = vector.shape_cast %152 : vector<1x352xf32> to vector<352xf32>
    %154 = vector.broadcast %151 : f32 to vector<352xf32>
    %155 = arith.mulf %154, %153 : vector<352xf32>
    %156 = arith.addf %150, %155 : vector<352xf32>
    %c3 = arith.constant 3 : index
    %157 = memref.load %arg1[%c3] : memref<98xf32, #tpu.memory_space<smem>>
    %c0_64 = arith.constant 0 : index
    %c3_65 = arith.constant 3 : index
    %158 = vector.load %arg4[%c0_64, %c3_65] : memref<2x490xf32, #tpu.memory_space<vmem>>, vector<1x352xf32>
    %159 = vector.shape_cast %158 : vector<1x352xf32> to vector<352xf32>
    %160 = vector.broadcast %157 : f32 to vector<352xf32>
    %161 = arith.mulf %160, %159 : vector<352xf32>
    %162 = arith.addf %156, %161 : vector<352xf32>
    %c4 = arith.constant 4 : index
    %163 = memref.load %arg1[%c4] : memref<98xf32, #tpu.memory_space<smem>>
    %c0_66 = arith.constant 0 : index
    %c4_67 = arith.constant 4 : index
    %164 = vector.load %arg4[%c0_66, %c4_67] : memref<2x490xf32, #tpu.memory_space<vmem>>, vector<1x352xf32>
    %165 = vector.shape_cast %164 : vector<1x352xf32> to vector<352xf32>
    %166 = vector.broadcast %163 : f32 to vector<352xf32>
    %167 = arith.mulf %166, %165 : vector<352xf32>
    %168 = arith.addf %162, %167 : vector<352xf32>
    %c5 = arith.constant 5 : index
    %169 = memref.load %arg1[%c5] : memref<98xf32, #tpu.memory_space<smem>>
    %c0_68 = arith.constant 0 : index
    %c5_69 = arith.constant 5 : index
    %170 = vector.load %arg4[%c0_68, %c5_69] : memref<2x490xf32, #tpu.memory_space<vmem>>, vector<1x352xf32>
    %171 = vector.shape_cast %170 : vector<1x352xf32> to vector<352xf32>
    %172 = vector.broadcast %169 : f32 to vector<352xf32>
    %173 = arith.mulf %172, %171 : vector<352xf32>
    %174 = arith.addf %168, %173 : vector<352xf32>
    %c6 = arith.constant 6 : index
    %175 = memref.load %arg1[%c6] : memref<98xf32, #tpu.memory_space<smem>>
    %c0_70 = arith.constant 0 : index
    %c6_71 = arith.constant 6 : index
    %176 = vector.load %arg4[%c0_70, %c6_71] : memref<2x490xf32, #tpu.memory_space<vmem>>, vector<1x352xf32>
    %177 = vector.shape_cast %176 : vector<1x352xf32> to vector<352xf32>
    %178 = vector.broadcast %175 : f32 to vector<352xf32>
    %179 = arith.mulf %178, %177 : vector<352xf32>
    %180 = arith.addf %174, %179 : vector<352xf32>
    %c7 = arith.constant 7 : index
    %181 = memref.load %arg1[%c7] : memref<98xf32, #tpu.memory_space<smem>>
    %c0_72 = arith.constant 0 : index
    %c22 = arith.constant 22 : index
    %182 = vector.load %arg4[%c0_72, %c22] : memref<2x490xf32, #tpu.memory_space<vmem>>, vector<1x352xf32>
    %183 = vector.shape_cast %182 : vector<1x352xf32> to vector<352xf32>
    %184 = vector.broadcast %181 : f32 to vector<352xf32>
    %185 = arith.mulf %184, %183 : vector<352xf32>
    %186 = arith.addf %180, %185 : vector<352xf32>
    %c8 = arith.constant 8 : index
    %187 = memref.load %arg1[%c8] : memref<98xf32, #tpu.memory_space<smem>>
    %c0_73 = arith.constant 0 : index
    %c23 = arith.constant 23 : index
    %188 = vector.load %arg4[%c0_73, %c23] : memref<2x490xf32, #tpu.memory_space<vmem>>, vector<1x352xf32>
    %189 = vector.shape_cast %188 : vector<1x352xf32> to vector<352xf32>
    %190 = vector.broadcast %187 : f32 to vector<352xf32>
    %191 = arith.mulf %190, %189 : vector<352xf32>
    %192 = arith.addf %186, %191 : vector<352xf32>
    %c9 = arith.constant 9 : index
    %193 = memref.load %arg1[%c9] : memref<98xf32, #tpu.memory_space<smem>>
    %c0_74 = arith.constant 0 : index
    %c24 = arith.constant 24 : index
    %194 = vector.load %arg4[%c0_74, %c24] : memref<2x490xf32, #tpu.memory_space<vmem>>, vector<1x352xf32>
    %195 = vector.shape_cast %194 : vector<1x352xf32> to vector<352xf32>
    %196 = vector.broadcast %193 : f32 to vector<352xf32>
    %197 = arith.mulf %196, %195 : vector<352xf32>
    %198 = arith.addf %192, %197 : vector<352xf32>
    %c10 = arith.constant 10 : index
    %199 = memref.load %arg1[%c10] : memref<98xf32, #tpu.memory_space<smem>>
    %c0_75 = arith.constant 0 : index
    %c25 = arith.constant 25 : index
    %200 = vector.load %arg4[%c0_75, %c25] : memref<2x490xf32, #tpu.memory_space<vmem>>, vector<1x352xf32>
    %201 = vector.shape_cast %200 : vector<1x352xf32> to vector<352xf32>
    %202 = vector.broadcast %199 : f32 to vector<352xf32>
    %203 = arith.mulf %202, %201 : vector<352xf32>
    %204 = arith.addf %198, %203 : vector<352xf32>
    %c11 = arith.constant 11 : index
    %205 = memref.load %arg1[%c11] : memref<98xf32, #tpu.memory_space<smem>>
    %c0_76 = arith.constant 0 : index
    %c26 = arith.constant 26 : index
    %206 = vector.load %arg4[%c0_76, %c26] : memref<2x490xf32, #tpu.memory_space<vmem>>, vector<1x352xf32>
    %207 = vector.shape_cast %206 : vector<1x352xf32> to vector<352xf32>
    %208 = vector.broadcast %205 : f32 to vector<352xf32>
    %209 = arith.mulf %208, %207 : vector<352xf32>
    %210 = arith.addf %204, %209 : vector<352xf32>
    %c12 = arith.constant 12 : index
    %211 = memref.load %arg1[%c12] : memref<98xf32, #tpu.memory_space<smem>>
    %c0_77 = arith.constant 0 : index
    %c27 = arith.constant 27 : index
    %212 = vector.load %arg4[%c0_77, %c27] : memref<2x490xf32, #tpu.memory_space<vmem>>, vector<1x352xf32>
    %213 = vector.shape_cast %212 : vector<1x352xf32> to vector<352xf32>
    %214 = vector.broadcast %211 : f32 to vector<352xf32>
    %215 = arith.mulf %214, %213 : vector<352xf32>
    %216 = arith.addf %210, %215 : vector<352xf32>
    %c13 = arith.constant 13 : index
    %217 = memref.load %arg1[%c13] : memref<98xf32, #tpu.memory_space<smem>>
    %c0_78 = arith.constant 0 : index
    %c28 = arith.constant 28 : index
    %218 = vector.load %arg4[%c0_78, %c28] : memref<2x490xf32, #tpu.memory_space<vmem>>, vector<1x352xf32>
    %219 = vector.shape_cast %218 : vector<1x352xf32> to vector<352xf32>
    %220 = vector.broadcast %217 : f32 to vector<352xf32>
    %221 = arith.mulf %220, %219 : vector<352xf32>
    %222 = arith.addf %216, %221 : vector<352xf32>
    %c14 = arith.constant 14 : index
    %223 = memref.load %arg1[%c14] : memref<98xf32, #tpu.memory_space<smem>>
    %c0_79 = arith.constant 0 : index
    %c44 = arith.constant 44 : index
    %224 = vector.load %arg4[%c0_79, %c44] : memref<2x490xf32, #tpu.memory_space<vmem>>, vector<1x352xf32>
    %225 = vector.shape_cast %224 : vector<1x352xf32> to vector<352xf32>
    %226 = vector.broadcast %223 : f32 to vector<352xf32>
    %227 = arith.mulf %226, %225 : vector<352xf32>
    %228 = arith.addf %222, %227 : vector<352xf32>
    %c15 = arith.constant 15 : index
    %229 = memref.load %arg1[%c15] : memref<98xf32, #tpu.memory_space<smem>>
    %c0_80 = arith.constant 0 : index
    %c45 = arith.constant 45 : index
    %230 = vector.load %arg4[%c0_80, %c45] : memref<2x490xf32, #tpu.memory_space<vmem>>, vector<1x352xf32>
    %231 = vector.shape_cast %230 : vector<1x352xf32> to vector<352xf32>
    %232 = vector.broadcast %229 : f32 to vector<352xf32>
    %233 = arith.mulf %232, %231 : vector<352xf32>
    %234 = arith.addf %228, %233 : vector<352xf32>
    %c16 = arith.constant 16 : index
    %235 = memref.load %arg1[%c16] : memref<98xf32, #tpu.memory_space<smem>>
    %c0_81 = arith.constant 0 : index
    %c46 = arith.constant 46 : index
    %236 = vector.load %arg4[%c0_81, %c46] : memref<2x490xf32, #tpu.memory_space<vmem>>, vector<1x352xf32>
    %237 = vector.shape_cast %236 : vector<1x352xf32> to vector<352xf32>
    %238 = vector.broadcast %235 : f32 to vector<352xf32>
    %239 = arith.mulf %238, %237 : vector<352xf32>
    %240 = arith.addf %234, %239 : vector<352xf32>
    %c17 = arith.constant 17 : index
    %241 = memref.load %arg1[%c17] : memref<98xf32, #tpu.memory_space<smem>>
    %c0_82 = arith.constant 0 : index
    %c47 = arith.constant 47 : index
    %242 = vector.load %arg4[%c0_82, %c47] : memref<2x490xf32, #tpu.memory_space<vmem>>, vector<1x352xf32>
    %243 = vector.shape_cast %242 : vector<1x352xf32> to vector<352xf32>
    %244 = vector.broadcast %241 : f32 to vector<352xf32>
    %245 = arith.mulf %244, %243 : vector<352xf32>
    %246 = arith.addf %240, %245 : vector<352xf32>
    %c18 = arith.constant 18 : index
    %247 = memref.load %arg1[%c18] : memref<98xf32, #tpu.memory_space<smem>>
    %c0_83 = arith.constant 0 : index
    %c48 = arith.constant 48 : index
    %248 = vector.load %arg4[%c0_83, %c48] : memref<2x490xf32, #tpu.memory_space<vmem>>, vector<1x352xf32>
    %249 = vector.shape_cast %248 : vector<1x352xf32> to vector<352xf32>
    %250 = vector.broadcast %247 : f32 to vector<352xf32>
    %251 = arith.mulf %250, %249 : vector<352xf32>
    %252 = arith.addf %246, %251 : vector<352xf32>
    %c19 = arith.constant 19 : index
    %253 = memref.load %arg1[%c19] : memref<98xf32, #tpu.memory_space<smem>>
    %c0_84 = arith.constant 0 : index
    %c49 = arith.constant 49 : index
    %254 = vector.load %arg4[%c0_84, %c49] : memref<2x490xf32, #tpu.memory_space<vmem>>, vector<1x352xf32>
    %255 = vector.shape_cast %254 : vector<1x352xf32> to vector<352xf32>
    %256 = vector.broadcast %253 : f32 to vector<352xf32>
    %257 = arith.mulf %256, %255 : vector<352xf32>
    %258 = arith.addf %252, %257 : vector<352xf32>
    %c20 = arith.constant 20 : index
    %259 = memref.load %arg1[%c20] : memref<98xf32, #tpu.memory_space<smem>>
    %c0_85 = arith.constant 0 : index
    %c50 = arith.constant 50 : index
    %260 = vector.load %arg4[%c0_85, %c50] : memref<2x490xf32, #tpu.memory_space<vmem>>, vector<1x352xf32>
    %261 = vector.shape_cast %260 : vector<1x352xf32> to vector<352xf32>
    %262 = vector.broadcast %259 : f32 to vector<352xf32>
    %263 = arith.mulf %262, %261 : vector<352xf32>
    %264 = arith.addf %258, %263 : vector<352xf32>
    %c21 = arith.constant 21 : index
    %265 = memref.load %arg1[%c21] : memref<98xf32, #tpu.memory_space<smem>>
    %c0_86 = arith.constant 0 : index
    %c66 = arith.constant 66 : index
    %266 = vector.load %arg4[%c0_86, %c66] : memref<2x490xf32, #tpu.memory_space<vmem>>, vector<1x352xf32>
    %267 = vector.shape_cast %266 : vector<1x352xf32> to vector<352xf32>
    %268 = vector.broadcast %265 : f32 to vector<352xf32>
    %269 = arith.mulf %268, %267 : vector<352xf32>
    %270 = arith.addf %264, %269 : vector<352xf32>
    %c22_87 = arith.constant 22 : index
    %271 = memref.load %arg1[%c22_87] : memref<98xf32, #tpu.memory_space<smem>>
    %c0_88 = arith.constant 0 : index
    %c67 = arith.constant 67 : index
    %272 = vector.load %arg4[%c0_88, %c67] : memref<2x490xf32, #tpu.memory_space<vmem>>, vector<1x352xf32>
    %273 = vector.shape_cast %272 : vector<1x352xf32> to vector<352xf32>
    %274 = vector.broadcast %271 : f32 to vector<352xf32>
    %275 = arith.mulf %274, %273 : vector<352xf32>
    %276 = arith.addf %270, %275 : vector<352xf32>
    %c23_89 = arith.constant 23 : index
    %277 = memref.load %arg1[%c23_89] : memref<98xf32, #tpu.memory_space<smem>>
    %c0_90 = arith.constant 0 : index
    %c68 = arith.constant 68 : index
    %278 = vector.load %arg4[%c0_90, %c68] : memref<2x490xf32, #tpu.memory_space<vmem>>, vector<1x352xf32>
    %279 = vector.shape_cast %278 : vector<1x352xf32> to vector<352xf32>
    %280 = vector.broadcast %277 : f32 to vector<352xf32>
    %281 = arith.mulf %280, %279 : vector<352xf32>
    %282 = arith.addf %276, %281 : vector<352xf32>
    %c24_91 = arith.constant 24 : index
    %283 = memref.load %arg1[%c24_91] : memref<98xf32, #tpu.memory_space<smem>>
    %c0_92 = arith.constant 0 : index
    %c69_93 = arith.constant 69 : index
    %284 = vector.load %arg4[%c0_92, %c69_93] : memref<2x490xf32, #tpu.memory_space<vmem>>, vector<1x352xf32>
    %285 = vector.shape_cast %284 : vector<1x352xf32> to vector<352xf32>
    %286 = vector.broadcast %283 : f32 to vector<352xf32>
    %287 = arith.mulf %286, %285 : vector<352xf32>
    %288 = arith.addf %282, %287 : vector<352xf32>
    %c25_94 = arith.constant 25 : index
    %289 = memref.load %arg1[%c25_94] : memref<98xf32, #tpu.memory_space<smem>>
    %c0_95 = arith.constant 0 : index
    %c70 = arith.constant 70 : index
    %290 = vector.load %arg4[%c0_95, %c70] : memref<2x490xf32, #tpu.memory_space<vmem>>, vector<1x352xf32>
    %291 = vector.shape_cast %290 : vector<1x352xf32> to vector<352xf32>
    %292 = vector.broadcast %289 : f32 to vector<352xf32>
    %293 = arith.mulf %292, %291 : vector<352xf32>
    %294 = arith.addf %288, %293 : vector<352xf32>
    %c26_96 = arith.constant 26 : index
    %295 = memref.load %arg1[%c26_96] : memref<98xf32, #tpu.memory_space<smem>>
    %c0_97 = arith.constant 0 : index
    %c71 = arith.constant 71 : index
    %296 = vector.load %arg4[%c0_97, %c71] : memref<2x490xf32, #tpu.memory_space<vmem>>, vector<1x352xf32>
    %297 = vector.shape_cast %296 : vector<1x352xf32> to vector<352xf32>
    %298 = vector.broadcast %295 : f32 to vector<352xf32>
    %299 = arith.mulf %298, %297 : vector<352xf32>
    %300 = arith.addf %294, %299 : vector<352xf32>
    %c27_98 = arith.constant 27 : index
    %301 = memref.load %arg1[%c27_98] : memref<98xf32, #tpu.memory_space<smem>>
    %c0_99 = arith.constant 0 : index
    %c72 = arith.constant 72 : index
    %302 = vector.load %arg4[%c0_99, %c72] : memref<2x490xf32, #tpu.memory_space<vmem>>, vector<1x352xf32>
    %303 = vector.shape_cast %302 : vector<1x352xf32> to vector<352xf32>
    %304 = vector.broadcast %301 : f32 to vector<352xf32>
    %305 = arith.mulf %304, %303 : vector<352xf32>
    %306 = arith.addf %300, %305 : vector<352xf32>
    %c28_100 = arith.constant 28 : index
    %307 = memref.load %arg1[%c28_100] : memref<98xf32, #tpu.memory_space<smem>>
    %c0_101 = arith.constant 0 : index
    %c88 = arith.constant 88 : index
    %308 = vector.load %arg4[%c0_101, %c88] : memref<2x490xf32, #tpu.memory_space<vmem>>, vector<1x352xf32>
    %309 = vector.shape_cast %308 : vector<1x352xf32> to vector<352xf32>
    %310 = vector.broadcast %307 : f32 to vector<352xf32>
    %311 = arith.mulf %310, %309 : vector<352xf32>
    %312 = arith.addf %306, %311 : vector<352xf32>
    %c29 = arith.constant 29 : index
    %313 = memref.load %arg1[%c29] : memref<98xf32, #tpu.memory_space<smem>>
    %c0_102 = arith.constant 0 : index
    %c89 = arith.constant 89 : index
    %314 = vector.load %arg4[%c0_102, %c89] : memref<2x490xf32, #tpu.memory_space<vmem>>, vector<1x352xf32>
    %315 = vector.shape_cast %314 : vector<1x352xf32> to vector<352xf32>
    %316 = vector.broadcast %313 : f32 to vector<352xf32>
    %317 = arith.mulf %316, %315 : vector<352xf32>
    %318 = arith.addf %312, %317 : vector<352xf32>
    %c30 = arith.constant 30 : index
    %319 = memref.load %arg1[%c30] : memref<98xf32, #tpu.memory_space<smem>>
    %c0_103 = arith.constant 0 : index
    %c90 = arith.constant 90 : index
    %320 = vector.load %arg4[%c0_103, %c90] : memref<2x490xf32, #tpu.memory_space<vmem>>, vector<1x352xf32>
    %321 = vector.shape_cast %320 : vector<1x352xf32> to vector<352xf32>
    %322 = vector.broadcast %319 : f32 to vector<352xf32>
    %323 = arith.mulf %322, %321 : vector<352xf32>
    %324 = arith.addf %318, %323 : vector<352xf32>
    %c31 = arith.constant 31 : index
    %325 = memref.load %arg1[%c31] : memref<98xf32, #tpu.memory_space<smem>>
    %c0_104 = arith.constant 0 : index
    %c91_105 = arith.constant 91 : index
    %326 = vector.load %arg4[%c0_104, %c91_105] : memref<2x490xf32, #tpu.memory_space<vmem>>, vector<1x352xf32>
    %327 = vector.shape_cast %326 : vector<1x352xf32> to vector<352xf32>
    %328 = vector.broadcast %325 : f32 to vector<352xf32>
    %329 = arith.mulf %328, %327 : vector<352xf32>
    %330 = arith.addf %324, %329 : vector<352xf32>
    %c32 = arith.constant 32 : index
    %331 = memref.load %arg1[%c32] : memref<98xf32, #tpu.memory_space<smem>>
    %c0_106 = arith.constant 0 : index
    %c92 = arith.constant 92 : index
    %332 = vector.load %arg4[%c0_106, %c92] : memref<2x490xf32, #tpu.memory_space<vmem>>, vector<1x352xf32>
    %333 = vector.shape_cast %332 : vector<1x352xf32> to vector<352xf32>
    %334 = vector.broadcast %331 : f32 to vector<352xf32>
    %335 = arith.mulf %334, %333 : vector<352xf32>
    %336 = arith.addf %330, %335 : vector<352xf32>
    %c33 = arith.constant 33 : index
    %337 = memref.load %arg1[%c33] : memref<98xf32, #tpu.memory_space<smem>>
    %c0_107 = arith.constant 0 : index
    %c93 = arith.constant 93 : index
    %338 = vector.load %arg4[%c0_107, %c93] : memref<2x490xf32, #tpu.memory_space<vmem>>, vector<1x352xf32>
    %339 = vector.shape_cast %338 : vector<1x352xf32> to vector<352xf32>
    %340 = vector.broadcast %337 : f32 to vector<352xf32>
    %341 = arith.mulf %340, %339 : vector<352xf32>
    %342 = arith.addf %336, %341 : vector<352xf32>
    %c34 = arith.constant 34 : index
    %343 = memref.load %arg1[%c34] : memref<98xf32, #tpu.memory_space<smem>>
    %c0_108 = arith.constant 0 : index
    %c94 = arith.constant 94 : index
    %344 = vector.load %arg4[%c0_108, %c94] : memref<2x490xf32, #tpu.memory_space<vmem>>, vector<1x352xf32>
    %345 = vector.shape_cast %344 : vector<1x352xf32> to vector<352xf32>
    %346 = vector.broadcast %343 : f32 to vector<352xf32>
    %347 = arith.mulf %346, %345 : vector<352xf32>
    %348 = arith.addf %342, %347 : vector<352xf32>
    %c35 = arith.constant 35 : index
    %349 = memref.load %arg1[%c35] : memref<98xf32, #tpu.memory_space<smem>>
    %c0_109 = arith.constant 0 : index
    %c110 = arith.constant 110 : index
    %350 = vector.load %arg4[%c0_109, %c110] : memref<2x490xf32, #tpu.memory_space<vmem>>, vector<1x352xf32>
    %351 = vector.shape_cast %350 : vector<1x352xf32> to vector<352xf32>
    %352 = vector.broadcast %349 : f32 to vector<352xf32>
    %353 = arith.mulf %352, %351 : vector<352xf32>
    %354 = arith.addf %348, %353 : vector<352xf32>
    %c36 = arith.constant 36 : index
    %355 = memref.load %arg1[%c36] : memref<98xf32, #tpu.memory_space<smem>>
    %c0_110 = arith.constant 0 : index
    %c111 = arith.constant 111 : index
    %356 = vector.load %arg4[%c0_110, %c111] : memref<2x490xf32, #tpu.memory_space<vmem>>, vector<1x352xf32>
    %357 = vector.shape_cast %356 : vector<1x352xf32> to vector<352xf32>
    %358 = vector.broadcast %355 : f32 to vector<352xf32>
    %359 = arith.mulf %358, %357 : vector<352xf32>
    %360 = arith.addf %354, %359 : vector<352xf32>
    %c37 = arith.constant 37 : index
    %361 = memref.load %arg1[%c37] : memref<98xf32, #tpu.memory_space<smem>>
    %c0_111 = arith.constant 0 : index
    %c112 = arith.constant 112 : index
    %362 = vector.load %arg4[%c0_111, %c112] : memref<2x490xf32, #tpu.memory_space<vmem>>, vector<1x352xf32>
    %363 = vector.shape_cast %362 : vector<1x352xf32> to vector<352xf32>
    %364 = vector.broadcast %361 : f32 to vector<352xf32>
    %365 = arith.mulf %364, %363 : vector<352xf32>
    %366 = arith.addf %360, %365 : vector<352xf32>
    %c38 = arith.constant 38 : index
    %367 = memref.load %arg1[%c38] : memref<98xf32, #tpu.memory_space<smem>>
    %c0_112 = arith.constant 0 : index
    %c113_113 = arith.constant 113 : index
    %368 = vector.load %arg4[%c0_112, %c113_113] : memref<2x490xf32, #tpu.memory_space<vmem>>, vector<1x352xf32>
    %369 = vector.shape_cast %368 : vector<1x352xf32> to vector<352xf32>
    %370 = vector.broadcast %367 : f32 to vector<352xf32>
    %371 = arith.mulf %370, %369 : vector<352xf32>
    %372 = arith.addf %366, %371 : vector<352xf32>
    %c39 = arith.constant 39 : index
    %373 = memref.load %arg1[%c39] : memref<98xf32, #tpu.memory_space<smem>>
    %c0_114 = arith.constant 0 : index
    %c114 = arith.constant 114 : index
    %374 = vector.load %arg4[%c0_114, %c114] : memref<2x490xf32, #tpu.memory_space<vmem>>, vector<1x352xf32>
    %375 = vector.shape_cast %374 : vector<1x352xf32> to vector<352xf32>
    %376 = vector.broadcast %373 : f32 to vector<352xf32>
    %377 = arith.mulf %376, %375 : vector<352xf32>
    %378 = arith.addf %372, %377 : vector<352xf32>
    %c40 = arith.constant 40 : index
    %379 = memref.load %arg1[%c40] : memref<98xf32, #tpu.memory_space<smem>>
    %c0_115 = arith.constant 0 : index
    %c115 = arith.constant 115 : index
    %380 = vector.load %arg4[%c0_115, %c115] : memref<2x490xf32, #tpu.memory_space<vmem>>, vector<1x352xf32>
    %381 = vector.shape_cast %380 : vector<1x352xf32> to vector<352xf32>
    %382 = vector.broadcast %379 : f32 to vector<352xf32>
    %383 = arith.mulf %382, %381 : vector<352xf32>
    %384 = arith.addf %378, %383 : vector<352xf32>
    %c41 = arith.constant 41 : index
    %385 = memref.load %arg1[%c41] : memref<98xf32, #tpu.memory_space<smem>>
    %c0_116 = arith.constant 0 : index
    %c116 = arith.constant 116 : index
    %386 = vector.load %arg4[%c0_116, %c116] : memref<2x490xf32, #tpu.memory_space<vmem>>, vector<1x352xf32>
    %387 = vector.shape_cast %386 : vector<1x352xf32> to vector<352xf32>
    %388 = vector.broadcast %385 : f32 to vector<352xf32>
    %389 = arith.mulf %388, %387 : vector<352xf32>
    %390 = arith.addf %384, %389 : vector<352xf32>
    %c42 = arith.constant 42 : index
    %391 = memref.load %arg1[%c42] : memref<98xf32, #tpu.memory_space<smem>>
    %c0_117 = arith.constant 0 : index
    %c132 = arith.constant 132 : index
    %392 = vector.load %arg4[%c0_117, %c132] : memref<2x490xf32, #tpu.memory_space<vmem>>, vector<1x352xf32>
    %393 = vector.shape_cast %392 : vector<1x352xf32> to vector<352xf32>
    %394 = vector.broadcast %391 : f32 to vector<352xf32>
    %395 = arith.mulf %394, %393 : vector<352xf32>
    %396 = arith.addf %390, %395 : vector<352xf32>
    %c43 = arith.constant 43 : index
    %397 = memref.load %arg1[%c43] : memref<98xf32, #tpu.memory_space<smem>>
    %c0_118 = arith.constant 0 : index
    %c133 = arith.constant 133 : index
    %398 = vector.load %arg4[%c0_118, %c133] : memref<2x490xf32, #tpu.memory_space<vmem>>, vector<1x352xf32>
    %399 = vector.shape_cast %398 : vector<1x352xf32> to vector<352xf32>
    %400 = vector.broadcast %397 : f32 to vector<352xf32>
    %401 = arith.mulf %400, %399 : vector<352xf32>
    %402 = arith.addf %396, %401 : vector<352xf32>
    %c44_119 = arith.constant 44 : index
    %403 = memref.load %arg1[%c44_119] : memref<98xf32, #tpu.memory_space<smem>>
    %c0_120 = arith.constant 0 : index
    %c134 = arith.constant 134 : index
    %404 = vector.load %arg4[%c0_120, %c134] : memref<2x490xf32, #tpu.memory_space<vmem>>, vector<1x352xf32>
    %405 = vector.shape_cast %404 : vector<1x352xf32> to vector<352xf32>
    %406 = vector.broadcast %403 : f32 to vector<352xf32>
    %407 = arith.mulf %406, %405 : vector<352xf32>
    %408 = arith.addf %402, %407 : vector<352xf32>
    %c45_121 = arith.constant 45 : index
    %409 = memref.load %arg1[%c45_121] : memref<98xf32, #tpu.memory_space<smem>>
    %c0_122 = arith.constant 0 : index
    %c135_123 = arith.constant 135 : index
    %410 = vector.load %arg4[%c0_122, %c135_123] : memref<2x490xf32, #tpu.memory_space<vmem>>, vector<1x352xf32>
    %411 = vector.shape_cast %410 : vector<1x352xf32> to vector<352xf32>
    %412 = vector.broadcast %409 : f32 to vector<352xf32>
    %413 = arith.mulf %412, %411 : vector<352xf32>
    %414 = arith.addf %408, %413 : vector<352xf32>
    %c46_124 = arith.constant 46 : index
    %415 = memref.load %arg1[%c46_124] : memref<98xf32, #tpu.memory_space<smem>>
    %c0_125 = arith.constant 0 : index
    %c136 = arith.constant 136 : index
    %416 = vector.load %arg4[%c0_125, %c136] : memref<2x490xf32, #tpu.memory_space<vmem>>, vector<1x352xf32>
    %417 = vector.shape_cast %416 : vector<1x352xf32> to vector<352xf32>
    %418 = vector.broadcast %415 : f32 to vector<352xf32>
    %419 = arith.mulf %418, %417 : vector<352xf32>
    %420 = arith.addf %414, %419 : vector<352xf32>
    %c47_126 = arith.constant 47 : index
    %421 = memref.load %arg1[%c47_126] : memref<98xf32, #tpu.memory_space<smem>>
    %c0_127 = arith.constant 0 : index
    %c137 = arith.constant 137 : index
    %422 = vector.load %arg4[%c0_127, %c137] : memref<2x490xf32, #tpu.memory_space<vmem>>, vector<1x352xf32>
    %423 = vector.shape_cast %422 : vector<1x352xf32> to vector<352xf32>
    %424 = vector.broadcast %421 : f32 to vector<352xf32>
    %425 = arith.mulf %424, %423 : vector<352xf32>
    %426 = arith.addf %420, %425 : vector<352xf32>
    %c48_128 = arith.constant 48 : index
    %427 = memref.load %arg1[%c48_128] : memref<98xf32, #tpu.memory_space<smem>>
    %c0_129 = arith.constant 0 : index
    %c138 = arith.constant 138 : index
    %428 = vector.load %arg4[%c0_129, %c138] : memref<2x490xf32, #tpu.memory_space<vmem>>, vector<1x352xf32>
    %429 = vector.shape_cast %428 : vector<1x352xf32> to vector<352xf32>
    %430 = vector.broadcast %427 : f32 to vector<352xf32>
    %431 = arith.mulf %430, %429 : vector<352xf32>
    %432 = arith.addf %426, %431 : vector<352xf32>
    %c49_130 = arith.constant 49 : index
    %433 = memref.load %arg1[%c49_130] : memref<98xf32, #tpu.memory_space<smem>>
    %c1_131 = arith.constant 1 : index
    %c0_132 = arith.constant 0 : index
    %434 = vector.load %arg4[%c1_131, %c0_132] : memref<2x490xf32, #tpu.memory_space<vmem>>, vector<1x352xf32>
    %435 = vector.shape_cast %434 : vector<1x352xf32> to vector<352xf32>
    %436 = vector.broadcast %433 : f32 to vector<352xf32>
    %437 = arith.mulf %436, %435 : vector<352xf32>
    %438 = arith.addf %432, %437 : vector<352xf32>
    %c50_133 = arith.constant 50 : index
    %439 = memref.load %arg1[%c50_133] : memref<98xf32, #tpu.memory_space<smem>>
    %c1_134 = arith.constant 1 : index
    %c1_135 = arith.constant 1 : index
    %440 = vector.load %arg4[%c1_134, %c1_135] : memref<2x490xf32, #tpu.memory_space<vmem>>, vector<1x352xf32>
    %441 = vector.shape_cast %440 : vector<1x352xf32> to vector<352xf32>
    %442 = vector.broadcast %439 : f32 to vector<352xf32>
    %443 = arith.mulf %442, %441 : vector<352xf32>
    %444 = arith.addf %438, %443 : vector<352xf32>
    %c51 = arith.constant 51 : index
    %445 = memref.load %arg1[%c51] : memref<98xf32, #tpu.memory_space<smem>>
    %c1_136 = arith.constant 1 : index
    %c2_137 = arith.constant 2 : index
    %446 = vector.load %arg4[%c1_136, %c2_137] : memref<2x490xf32, #tpu.memory_space<vmem>>, vector<1x352xf32>
    %447 = vector.shape_cast %446 : vector<1x352xf32> to vector<352xf32>
    %448 = vector.broadcast %445 : f32 to vector<352xf32>
    %449 = arith.mulf %448, %447 : vector<352xf32>
    %450 = arith.addf %444, %449 : vector<352xf32>
    %c52 = arith.constant 52 : index
    %451 = memref.load %arg1[%c52] : memref<98xf32, #tpu.memory_space<smem>>
    %c1_138 = arith.constant 1 : index
    %c3_139 = arith.constant 3 : index
    %452 = vector.load %arg4[%c1_138, %c3_139] : memref<2x490xf32, #tpu.memory_space<vmem>>, vector<1x352xf32>
    %453 = vector.shape_cast %452 : vector<1x352xf32> to vector<352xf32>
    %454 = vector.broadcast %451 : f32 to vector<352xf32>
    %455 = arith.mulf %454, %453 : vector<352xf32>
    %456 = arith.addf %450, %455 : vector<352xf32>
    %c53 = arith.constant 53 : index
    %457 = memref.load %arg1[%c53] : memref<98xf32, #tpu.memory_space<smem>>
    %c1_140 = arith.constant 1 : index
    %c4_141 = arith.constant 4 : index
    %458 = vector.load %arg4[%c1_140, %c4_141] : memref<2x490xf32, #tpu.memory_space<vmem>>, vector<1x352xf32>
    %459 = vector.shape_cast %458 : vector<1x352xf32> to vector<352xf32>
    %460 = vector.broadcast %457 : f32 to vector<352xf32>
    %461 = arith.mulf %460, %459 : vector<352xf32>
    %462 = arith.addf %456, %461 : vector<352xf32>
    %c54 = arith.constant 54 : index
    %463 = memref.load %arg1[%c54] : memref<98xf32, #tpu.memory_space<smem>>
    %c1_142 = arith.constant 1 : index
    %c5_143 = arith.constant 5 : index
    %464 = vector.load %arg4[%c1_142, %c5_143] : memref<2x490xf32, #tpu.memory_space<vmem>>, vector<1x352xf32>
    %465 = vector.shape_cast %464 : vector<1x352xf32> to vector<352xf32>
    %466 = vector.broadcast %463 : f32 to vector<352xf32>
    %467 = arith.mulf %466, %465 : vector<352xf32>
    %468 = arith.addf %462, %467 : vector<352xf32>
    %c55 = arith.constant 55 : index
    %469 = memref.load %arg1[%c55] : memref<98xf32, #tpu.memory_space<smem>>
    %c1_144 = arith.constant 1 : index
    %c6_145 = arith.constant 6 : index
    %470 = vector.load %arg4[%c1_144, %c6_145] : memref<2x490xf32, #tpu.memory_space<vmem>>, vector<1x352xf32>
    %471 = vector.shape_cast %470 : vector<1x352xf32> to vector<352xf32>
    %472 = vector.broadcast %469 : f32 to vector<352xf32>
    %473 = arith.mulf %472, %471 : vector<352xf32>
    %474 = arith.addf %468, %473 : vector<352xf32>
    %c56 = arith.constant 56 : index
    %475 = memref.load %arg1[%c56] : memref<98xf32, #tpu.memory_space<smem>>
    %c1_146 = arith.constant 1 : index
    %c22_147 = arith.constant 22 : index
    %476 = vector.load %arg4[%c1_146, %c22_147] : memref<2x490xf32, #tpu.memory_space<vmem>>, vector<1x352xf32>
    %477 = vector.shape_cast %476 : vector<1x352xf32> to vector<352xf32>
    %478 = vector.broadcast %475 : f32 to vector<352xf32>
    %479 = arith.mulf %478, %477 : vector<352xf32>
    %480 = arith.addf %474, %479 : vector<352xf32>
    %c57 = arith.constant 57 : index
    %481 = memref.load %arg1[%c57] : memref<98xf32, #tpu.memory_space<smem>>
    %c1_148 = arith.constant 1 : index
    %c23_149 = arith.constant 23 : index
    %482 = vector.load %arg4[%c1_148, %c23_149] : memref<2x490xf32, #tpu.memory_space<vmem>>, vector<1x352xf32>
    %483 = vector.shape_cast %482 : vector<1x352xf32> to vector<352xf32>
    %484 = vector.broadcast %481 : f32 to vector<352xf32>
    %485 = arith.mulf %484, %483 : vector<352xf32>
    %486 = arith.addf %480, %485 : vector<352xf32>
    %c58 = arith.constant 58 : index
    %487 = memref.load %arg1[%c58] : memref<98xf32, #tpu.memory_space<smem>>
    %c1_150 = arith.constant 1 : index
    %c24_151 = arith.constant 24 : index
    %488 = vector.load %arg4[%c1_150, %c24_151] : memref<2x490xf32, #tpu.memory_space<vmem>>, vector<1x352xf32>
    %489 = vector.shape_cast %488 : vector<1x352xf32> to vector<352xf32>
    %490 = vector.broadcast %487 : f32 to vector<352xf32>
    %491 = arith.mulf %490, %489 : vector<352xf32>
    %492 = arith.addf %486, %491 : vector<352xf32>
    %c59 = arith.constant 59 : index
    %493 = memref.load %arg1[%c59] : memref<98xf32, #tpu.memory_space<smem>>
    %c1_152 = arith.constant 1 : index
    %c25_153 = arith.constant 25 : index
    %494 = vector.load %arg4[%c1_152, %c25_153] : memref<2x490xf32, #tpu.memory_space<vmem>>, vector<1x352xf32>
    %495 = vector.shape_cast %494 : vector<1x352xf32> to vector<352xf32>
    %496 = vector.broadcast %493 : f32 to vector<352xf32>
    %497 = arith.mulf %496, %495 : vector<352xf32>
    %498 = arith.addf %492, %497 : vector<352xf32>
    %c60 = arith.constant 60 : index
    %499 = memref.load %arg1[%c60] : memref<98xf32, #tpu.memory_space<smem>>
    %c1_154 = arith.constant 1 : index
    %c26_155 = arith.constant 26 : index
    %500 = vector.load %arg4[%c1_154, %c26_155] : memref<2x490xf32, #tpu.memory_space<vmem>>, vector<1x352xf32>
    %501 = vector.shape_cast %500 : vector<1x352xf32> to vector<352xf32>
    %502 = vector.broadcast %499 : f32 to vector<352xf32>
    %503 = arith.mulf %502, %501 : vector<352xf32>
    %504 = arith.addf %498, %503 : vector<352xf32>
    %c61 = arith.constant 61 : index
    %505 = memref.load %arg1[%c61] : memref<98xf32, #tpu.memory_space<smem>>
    %c1_156 = arith.constant 1 : index
    %c27_157 = arith.constant 27 : index
    %506 = vector.load %arg4[%c1_156, %c27_157] : memref<2x490xf32, #tpu.memory_space<vmem>>, vector<1x352xf32>
    %507 = vector.shape_cast %506 : vector<1x352xf32> to vector<352xf32>
    %508 = vector.broadcast %505 : f32 to vector<352xf32>
    %509 = arith.mulf %508, %507 : vector<352xf32>
    %510 = arith.addf %504, %509 : vector<352xf32>
    %c62 = arith.constant 62 : index
    %511 = memref.load %arg1[%c62] : memref<98xf32, #tpu.memory_space<smem>>
    %c1_158 = arith.constant 1 : index
    %c28_159 = arith.constant 28 : index
    %512 = vector.load %arg4[%c1_158, %c28_159] : memref<2x490xf32, #tpu.memory_space<vmem>>, vector<1x352xf32>
    %513 = vector.shape_cast %512 : vector<1x352xf32> to vector<352xf32>
    %514 = vector.broadcast %511 : f32 to vector<352xf32>
    %515 = arith.mulf %514, %513 : vector<352xf32>
    %516 = arith.addf %510, %515 : vector<352xf32>
    %c63 = arith.constant 63 : index
    %517 = memref.load %arg1[%c63] : memref<98xf32, #tpu.memory_space<smem>>
    %c1_160 = arith.constant 1 : index
    %c44_161 = arith.constant 44 : index
    %518 = vector.load %arg4[%c1_160, %c44_161] : memref<2x490xf32, #tpu.memory_space<vmem>>, vector<1x352xf32>
    %519 = vector.shape_cast %518 : vector<1x352xf32> to vector<352xf32>
    %520 = vector.broadcast %517 : f32 to vector<352xf32>
    %521 = arith.mulf %520, %519 : vector<352xf32>
    %522 = arith.addf %516, %521 : vector<352xf32>
    %c64 = arith.constant 64 : index
    %523 = memref.load %arg1[%c64] : memref<98xf32, #tpu.memory_space<smem>>
    %c1_162 = arith.constant 1 : index
    %c45_163 = arith.constant 45 : index
    %524 = vector.load %arg4[%c1_162, %c45_163] : memref<2x490xf32, #tpu.memory_space<vmem>>, vector<1x352xf32>
    %525 = vector.shape_cast %524 : vector<1x352xf32> to vector<352xf32>
    %526 = vector.broadcast %523 : f32 to vector<352xf32>
    %527 = arith.mulf %526, %525 : vector<352xf32>
    %528 = arith.addf %522, %527 : vector<352xf32>
    %c65 = arith.constant 65 : index
    %529 = memref.load %arg1[%c65] : memref<98xf32, #tpu.memory_space<smem>>
    %c1_164 = arith.constant 1 : index
    %c46_165 = arith.constant 46 : index
    %530 = vector.load %arg4[%c1_164, %c46_165] : memref<2x490xf32, #tpu.memory_space<vmem>>, vector<1x352xf32>
    %531 = vector.shape_cast %530 : vector<1x352xf32> to vector<352xf32>
    %532 = vector.broadcast %529 : f32 to vector<352xf32>
    %533 = arith.mulf %532, %531 : vector<352xf32>
    %534 = arith.addf %528, %533 : vector<352xf32>
    %c66_166 = arith.constant 66 : index
    %535 = memref.load %arg1[%c66_166] : memref<98xf32, #tpu.memory_space<smem>>
    %c1_167 = arith.constant 1 : index
    %c47_168 = arith.constant 47 : index
    %536 = vector.load %arg4[%c1_167, %c47_168] : memref<2x490xf32, #tpu.memory_space<vmem>>, vector<1x352xf32>
    %537 = vector.shape_cast %536 : vector<1x352xf32> to vector<352xf32>
    %538 = vector.broadcast %535 : f32 to vector<352xf32>
    %539 = arith.mulf %538, %537 : vector<352xf32>
    %540 = arith.addf %534, %539 : vector<352xf32>
    %c67_169 = arith.constant 67 : index
    %541 = memref.load %arg1[%c67_169] : memref<98xf32, #tpu.memory_space<smem>>
    %c1_170 = arith.constant 1 : index
    %c48_171 = arith.constant 48 : index
    %542 = vector.load %arg4[%c1_170, %c48_171] : memref<2x490xf32, #tpu.memory_space<vmem>>, vector<1x352xf32>
    %543 = vector.shape_cast %542 : vector<1x352xf32> to vector<352xf32>
    %544 = vector.broadcast %541 : f32 to vector<352xf32>
    %545 = arith.mulf %544, %543 : vector<352xf32>
    %546 = arith.addf %540, %545 : vector<352xf32>
    %c68_172 = arith.constant 68 : index
    %547 = memref.load %arg1[%c68_172] : memref<98xf32, #tpu.memory_space<smem>>
    %c1_173 = arith.constant 1 : index
    %c49_174 = arith.constant 49 : index
    %548 = vector.load %arg4[%c1_173, %c49_174] : memref<2x490xf32, #tpu.memory_space<vmem>>, vector<1x352xf32>
    %549 = vector.shape_cast %548 : vector<1x352xf32> to vector<352xf32>
    %550 = vector.broadcast %547 : f32 to vector<352xf32>
    %551 = arith.mulf %550, %549 : vector<352xf32>
    %552 = arith.addf %546, %551 : vector<352xf32>
    %c69_175 = arith.constant 69 : index
    %553 = memref.load %arg1[%c69_175] : memref<98xf32, #tpu.memory_space<smem>>
    %c1_176 = arith.constant 1 : index
    %c50_177 = arith.constant 50 : index
    %554 = vector.load %arg4[%c1_176, %c50_177] : memref<2x490xf32, #tpu.memory_space<vmem>>, vector<1x352xf32>
    %555 = vector.shape_cast %554 : vector<1x352xf32> to vector<352xf32>
    %556 = vector.broadcast %553 : f32 to vector<352xf32>
    %557 = arith.mulf %556, %555 : vector<352xf32>
    %558 = arith.addf %552, %557 : vector<352xf32>
    %c70_178 = arith.constant 70 : index
    %559 = memref.load %arg1[%c70_178] : memref<98xf32, #tpu.memory_space<smem>>
    %c1_179 = arith.constant 1 : index
    %c66_180 = arith.constant 66 : index
    %560 = vector.load %arg4[%c1_179, %c66_180] : memref<2x490xf32, #tpu.memory_space<vmem>>, vector<1x352xf32>
    %561 = vector.shape_cast %560 : vector<1x352xf32> to vector<352xf32>
    %562 = vector.broadcast %559 : f32 to vector<352xf32>
    %563 = arith.mulf %562, %561 : vector<352xf32>
    %564 = arith.addf %558, %563 : vector<352xf32>
    %c71_181 = arith.constant 71 : index
    %565 = memref.load %arg1[%c71_181] : memref<98xf32, #tpu.memory_space<smem>>
    %c1_182 = arith.constant 1 : index
    %c67_183 = arith.constant 67 : index
    %566 = vector.load %arg4[%c1_182, %c67_183] : memref<2x490xf32, #tpu.memory_space<vmem>>, vector<1x352xf32>
    %567 = vector.shape_cast %566 : vector<1x352xf32> to vector<352xf32>
    %568 = vector.broadcast %565 : f32 to vector<352xf32>
    %569 = arith.mulf %568, %567 : vector<352xf32>
    %570 = arith.addf %564, %569 : vector<352xf32>
    %c72_184 = arith.constant 72 : index
    %571 = memref.load %arg1[%c72_184] : memref<98xf32, #tpu.memory_space<smem>>
    %c1_185 = arith.constant 1 : index
    %c68_186 = arith.constant 68 : index
    %572 = vector.load %arg4[%c1_185, %c68_186] : memref<2x490xf32, #tpu.memory_space<vmem>>, vector<1x352xf32>
    %573 = vector.shape_cast %572 : vector<1x352xf32> to vector<352xf32>
    %574 = vector.broadcast %571 : f32 to vector<352xf32>
    %575 = arith.mulf %574, %573 : vector<352xf32>
    %576 = arith.addf %570, %575 : vector<352xf32>
    %c73 = arith.constant 73 : index
    %577 = memref.load %arg1[%c73] : memref<98xf32, #tpu.memory_space<smem>>
    %c1_187 = arith.constant 1 : index
    %c69_188 = arith.constant 69 : index
    %578 = vector.load %arg4[%c1_187, %c69_188] : memref<2x490xf32, #tpu.memory_space<vmem>>, vector<1x352xf32>
    %579 = vector.shape_cast %578 : vector<1x352xf32> to vector<352xf32>
    %580 = vector.broadcast %577 : f32 to vector<352xf32>
    %581 = arith.mulf %580, %579 : vector<352xf32>
    %582 = arith.addf %576, %581 : vector<352xf32>
    %c74 = arith.constant 74 : index
    %583 = memref.load %arg1[%c74] : memref<98xf32, #tpu.memory_space<smem>>
    %c1_189 = arith.constant 1 : index
    %c70_190 = arith.constant 70 : index
    %584 = vector.load %arg4[%c1_189, %c70_190] : memref<2x490xf32, #tpu.memory_space<vmem>>, vector<1x352xf32>
    %585 = vector.shape_cast %584 : vector<1x352xf32> to vector<352xf32>
    %586 = vector.broadcast %583 : f32 to vector<352xf32>
    %587 = arith.mulf %586, %585 : vector<352xf32>
    %588 = arith.addf %582, %587 : vector<352xf32>
    %c75 = arith.constant 75 : index
    %589 = memref.load %arg1[%c75] : memref<98xf32, #tpu.memory_space<smem>>
    %c1_191 = arith.constant 1 : index
    %c71_192 = arith.constant 71 : index
    %590 = vector.load %arg4[%c1_191, %c71_192] : memref<2x490xf32, #tpu.memory_space<vmem>>, vector<1x352xf32>
    %591 = vector.shape_cast %590 : vector<1x352xf32> to vector<352xf32>
    %592 = vector.broadcast %589 : f32 to vector<352xf32>
    %593 = arith.mulf %592, %591 : vector<352xf32>
    %594 = arith.addf %588, %593 : vector<352xf32>
    %c76 = arith.constant 76 : index
    %595 = memref.load %arg1[%c76] : memref<98xf32, #tpu.memory_space<smem>>
    %c1_193 = arith.constant 1 : index
    %c72_194 = arith.constant 72 : index
    %596 = vector.load %arg4[%c1_193, %c72_194] : memref<2x490xf32, #tpu.memory_space<vmem>>, vector<1x352xf32>
    %597 = vector.shape_cast %596 : vector<1x352xf32> to vector<352xf32>
    %598 = vector.broadcast %595 : f32 to vector<352xf32>
    %599 = arith.mulf %598, %597 : vector<352xf32>
    %600 = arith.addf %594, %599 : vector<352xf32>
    %c77 = arith.constant 77 : index
    %601 = memref.load %arg1[%c77] : memref<98xf32, #tpu.memory_space<smem>>
    %c1_195 = arith.constant 1 : index
    %c88_196 = arith.constant 88 : index
    %602 = vector.load %arg4[%c1_195, %c88_196] : memref<2x490xf32, #tpu.memory_space<vmem>>, vector<1x352xf32>
    %603 = vector.shape_cast %602 : vector<1x352xf32> to vector<352xf32>
    %604 = vector.broadcast %601 : f32 to vector<352xf32>
    %605 = arith.mulf %604, %603 : vector<352xf32>
    %606 = arith.addf %600, %605 : vector<352xf32>
    %c78 = arith.constant 78 : index
    %607 = memref.load %arg1[%c78] : memref<98xf32, #tpu.memory_space<smem>>
    %c1_197 = arith.constant 1 : index
    %c89_198 = arith.constant 89 : index
    %608 = vector.load %arg4[%c1_197, %c89_198] : memref<2x490xf32, #tpu.memory_space<vmem>>, vector<1x352xf32>
    %609 = vector.shape_cast %608 : vector<1x352xf32> to vector<352xf32>
    %610 = vector.broadcast %607 : f32 to vector<352xf32>
    %611 = arith.mulf %610, %609 : vector<352xf32>
    %612 = arith.addf %606, %611 : vector<352xf32>
    %c79 = arith.constant 79 : index
    %613 = memref.load %arg1[%c79] : memref<98xf32, #tpu.memory_space<smem>>
    %c1_199 = arith.constant 1 : index
    %c90_200 = arith.constant 90 : index
    %614 = vector.load %arg4[%c1_199, %c90_200] : memref<2x490xf32, #tpu.memory_space<vmem>>, vector<1x352xf32>
    %615 = vector.shape_cast %614 : vector<1x352xf32> to vector<352xf32>
    %616 = vector.broadcast %613 : f32 to vector<352xf32>
    %617 = arith.mulf %616, %615 : vector<352xf32>
    %618 = arith.addf %612, %617 : vector<352xf32>
    %c80 = arith.constant 80 : index
    %619 = memref.load %arg1[%c80] : memref<98xf32, #tpu.memory_space<smem>>
    %c1_201 = arith.constant 1 : index
    %c91_202 = arith.constant 91 : index
    %620 = vector.load %arg4[%c1_201, %c91_202] : memref<2x490xf32, #tpu.memory_space<vmem>>, vector<1x352xf32>
    %621 = vector.shape_cast %620 : vector<1x352xf32> to vector<352xf32>
    %622 = vector.broadcast %619 : f32 to vector<352xf32>
    %623 = arith.mulf %622, %621 : vector<352xf32>
    %624 = arith.addf %618, %623 : vector<352xf32>
    %c81 = arith.constant 81 : index
    %625 = memref.load %arg1[%c81] : memref<98xf32, #tpu.memory_space<smem>>
    %c1_203 = arith.constant 1 : index
    %c92_204 = arith.constant 92 : index
    %626 = vector.load %arg4[%c1_203, %c92_204] : memref<2x490xf32, #tpu.memory_space<vmem>>, vector<1x352xf32>
    %627 = vector.shape_cast %626 : vector<1x352xf32> to vector<352xf32>
    %628 = vector.broadcast %625 : f32 to vector<352xf32>
    %629 = arith.mulf %628, %627 : vector<352xf32>
    %630 = arith.addf %624, %629 : vector<352xf32>
    %c82 = arith.constant 82 : index
    %631 = memref.load %arg1[%c82] : memref<98xf32, #tpu.memory_space<smem>>
    %c1_205 = arith.constant 1 : index
    %c93_206 = arith.constant 93 : index
    %632 = vector.load %arg4[%c1_205, %c93_206] : memref<2x490xf32, #tpu.memory_space<vmem>>, vector<1x352xf32>
    %633 = vector.shape_cast %632 : vector<1x352xf32> to vector<352xf32>
    %634 = vector.broadcast %631 : f32 to vector<352xf32>
    %635 = arith.mulf %634, %633 : vector<352xf32>
    %636 = arith.addf %630, %635 : vector<352xf32>
    %c83 = arith.constant 83 : index
    %637 = memref.load %arg1[%c83] : memref<98xf32, #tpu.memory_space<smem>>
    %c1_207 = arith.constant 1 : index
    %c94_208 = arith.constant 94 : index
    %638 = vector.load %arg4[%c1_207, %c94_208] : memref<2x490xf32, #tpu.memory_space<vmem>>, vector<1x352xf32>
    %639 = vector.shape_cast %638 : vector<1x352xf32> to vector<352xf32>
    %640 = vector.broadcast %637 : f32 to vector<352xf32>
    %641 = arith.mulf %640, %639 : vector<352xf32>
    %642 = arith.addf %636, %641 : vector<352xf32>
    %c84 = arith.constant 84 : index
    %643 = memref.load %arg1[%c84] : memref<98xf32, #tpu.memory_space<smem>>
    %c1_209 = arith.constant 1 : index
    %c110_210 = arith.constant 110 : index
    %644 = vector.load %arg4[%c1_209, %c110_210] : memref<2x490xf32, #tpu.memory_space<vmem>>, vector<1x352xf32>
    %645 = vector.shape_cast %644 : vector<1x352xf32> to vector<352xf32>
    %646 = vector.broadcast %643 : f32 to vector<352xf32>
    %647 = arith.mulf %646, %645 : vector<352xf32>
    %648 = arith.addf %642, %647 : vector<352xf32>
    %c85 = arith.constant 85 : index
    %649 = memref.load %arg1[%c85] : memref<98xf32, #tpu.memory_space<smem>>
    %c1_211 = arith.constant 1 : index
    %c111_212 = arith.constant 111 : index
    %650 = vector.load %arg4[%c1_211, %c111_212] : memref<2x490xf32, #tpu.memory_space<vmem>>, vector<1x352xf32>
    %651 = vector.shape_cast %650 : vector<1x352xf32> to vector<352xf32>
    %652 = vector.broadcast %649 : f32 to vector<352xf32>
    %653 = arith.mulf %652, %651 : vector<352xf32>
    %654 = arith.addf %648, %653 : vector<352xf32>
    %c86 = arith.constant 86 : index
    %655 = memref.load %arg1[%c86] : memref<98xf32, #tpu.memory_space<smem>>
    %c1_213 = arith.constant 1 : index
    %c112_214 = arith.constant 112 : index
    %656 = vector.load %arg4[%c1_213, %c112_214] : memref<2x490xf32, #tpu.memory_space<vmem>>, vector<1x352xf32>
    %657 = vector.shape_cast %656 : vector<1x352xf32> to vector<352xf32>
    %658 = vector.broadcast %655 : f32 to vector<352xf32>
    %659 = arith.mulf %658, %657 : vector<352xf32>
    %660 = arith.addf %654, %659 : vector<352xf32>
    %c87 = arith.constant 87 : index
    %661 = memref.load %arg1[%c87] : memref<98xf32, #tpu.memory_space<smem>>
    %c1_215 = arith.constant 1 : index
    %c113_216 = arith.constant 113 : index
    %662 = vector.load %arg4[%c1_215, %c113_216] : memref<2x490xf32, #tpu.memory_space<vmem>>, vector<1x352xf32>
    %663 = vector.shape_cast %662 : vector<1x352xf32> to vector<352xf32>
    %664 = vector.broadcast %661 : f32 to vector<352xf32>
    %665 = arith.mulf %664, %663 : vector<352xf32>
    %666 = arith.addf %660, %665 : vector<352xf32>
    %c88_217 = arith.constant 88 : index
    %667 = memref.load %arg1[%c88_217] : memref<98xf32, #tpu.memory_space<smem>>
    %c1_218 = arith.constant 1 : index
    %c114_219 = arith.constant 114 : index
    %668 = vector.load %arg4[%c1_218, %c114_219] : memref<2x490xf32, #tpu.memory_space<vmem>>, vector<1x352xf32>
    %669 = vector.shape_cast %668 : vector<1x352xf32> to vector<352xf32>
    %670 = vector.broadcast %667 : f32 to vector<352xf32>
    %671 = arith.mulf %670, %669 : vector<352xf32>
    %672 = arith.addf %666, %671 : vector<352xf32>
    %c89_220 = arith.constant 89 : index
    %673 = memref.load %arg1[%c89_220] : memref<98xf32, #tpu.memory_space<smem>>
    %c1_221 = arith.constant 1 : index
    %c115_222 = arith.constant 115 : index
    %674 = vector.load %arg4[%c1_221, %c115_222] : memref<2x490xf32, #tpu.memory_space<vmem>>, vector<1x352xf32>
    %675 = vector.shape_cast %674 : vector<1x352xf32> to vector<352xf32>
    %676 = vector.broadcast %673 : f32 to vector<352xf32>
    %677 = arith.mulf %676, %675 : vector<352xf32>
    %678 = arith.addf %672, %677 : vector<352xf32>
    %c90_223 = arith.constant 90 : index
    %679 = memref.load %arg1[%c90_223] : memref<98xf32, #tpu.memory_space<smem>>
    %c1_224 = arith.constant 1 : index
    %c116_225 = arith.constant 116 : index
    %680 = vector.load %arg4[%c1_224, %c116_225] : memref<2x490xf32, #tpu.memory_space<vmem>>, vector<1x352xf32>
    %681 = vector.shape_cast %680 : vector<1x352xf32> to vector<352xf32>
    %682 = vector.broadcast %679 : f32 to vector<352xf32>
    %683 = arith.mulf %682, %681 : vector<352xf32>
    %684 = arith.addf %678, %683 : vector<352xf32>
    %c91_226 = arith.constant 91 : index
    %685 = memref.load %arg1[%c91_226] : memref<98xf32, #tpu.memory_space<smem>>
    %c1_227 = arith.constant 1 : index
    %c132_228 = arith.constant 132 : index
    %686 = vector.load %arg4[%c1_227, %c132_228] : memref<2x490xf32, #tpu.memory_space<vmem>>, vector<1x352xf32>
    %687 = vector.shape_cast %686 : vector<1x352xf32> to vector<352xf32>
    %688 = vector.broadcast %685 : f32 to vector<352xf32>
    %689 = arith.mulf %688, %687 : vector<352xf32>
    %690 = arith.addf %684, %689 : vector<352xf32>
    %c92_229 = arith.constant 92 : index
    %691 = memref.load %arg1[%c92_229] : memref<98xf32, #tpu.memory_space<smem>>
    %c1_230 = arith.constant 1 : index
    %c133_231 = arith.constant 133 : index
    %692 = vector.load %arg4[%c1_230, %c133_231] : memref<2x490xf32, #tpu.memory_space<vmem>>, vector<1x352xf32>
    %693 = vector.shape_cast %692 : vector<1x352xf32> to vector<352xf32>
    %694 = vector.broadcast %691 : f32 to vector<352xf32>
    %695 = arith.mulf %694, %693 : vector<352xf32>
    %696 = arith.addf %690, %695 : vector<352xf32>
    %c93_232 = arith.constant 93 : index
    %697 = memref.load %arg1[%c93_232] : memref<98xf32, #tpu.memory_space<smem>>
    %c1_233 = arith.constant 1 : index
    %c134_234 = arith.constant 134 : index
    %698 = vector.load %arg4[%c1_233, %c134_234] : memref<2x490xf32, #tpu.memory_space<vmem>>, vector<1x352xf32>
    %699 = vector.shape_cast %698 : vector<1x352xf32> to vector<352xf32>
    %700 = vector.broadcast %697 : f32 to vector<352xf32>
    %701 = arith.mulf %700, %699 : vector<352xf32>
    %702 = arith.addf %696, %701 : vector<352xf32>
    %c94_235 = arith.constant 94 : index
    %703 = memref.load %arg1[%c94_235] : memref<98xf32, #tpu.memory_space<smem>>
    %c1_236 = arith.constant 1 : index
    %c135_237 = arith.constant 135 : index
    %704 = vector.load %arg4[%c1_236, %c135_237] : memref<2x490xf32, #tpu.memory_space<vmem>>, vector<1x352xf32>
    %705 = vector.shape_cast %704 : vector<1x352xf32> to vector<352xf32>
    %706 = vector.broadcast %703 : f32 to vector<352xf32>
    %707 = arith.mulf %706, %705 : vector<352xf32>
    %708 = arith.addf %702, %707 : vector<352xf32>
    %c95 = arith.constant 95 : index
    %709 = memref.load %arg1[%c95] : memref<98xf32, #tpu.memory_space<smem>>
    %c1_238 = arith.constant 1 : index
    %c136_239 = arith.constant 136 : index
    %710 = vector.load %arg4[%c1_238, %c136_239] : memref<2x490xf32, #tpu.memory_space<vmem>>, vector<1x352xf32>
    %711 = vector.shape_cast %710 : vector<1x352xf32> to vector<352xf32>
    %712 = vector.broadcast %709 : f32 to vector<352xf32>
    %713 = arith.mulf %712, %711 : vector<352xf32>
    %714 = arith.addf %708, %713 : vector<352xf32>
    %c96 = arith.constant 96 : index
    %715 = memref.load %arg1[%c96] : memref<98xf32, #tpu.memory_space<smem>>
    %c1_240 = arith.constant 1 : index
    %c137_241 = arith.constant 137 : index
    %716 = vector.load %arg4[%c1_240, %c137_241] : memref<2x490xf32, #tpu.memory_space<vmem>>, vector<1x352xf32>
    %717 = vector.shape_cast %716 : vector<1x352xf32> to vector<352xf32>
    %718 = vector.broadcast %715 : f32 to vector<352xf32>
    %719 = arith.mulf %718, %717 : vector<352xf32>
    %720 = arith.addf %714, %719 : vector<352xf32>
    %c97 = arith.constant 97 : index
    %721 = memref.load %arg1[%c97] : memref<98xf32, #tpu.memory_space<smem>>
    %c1_242 = arith.constant 1 : index
    %c138_243 = arith.constant 138 : index
    %722 = vector.load %arg4[%c1_242, %c138_243] : memref<2x490xf32, #tpu.memory_space<vmem>>, vector<1x352xf32>
    %723 = vector.shape_cast %722 : vector<1x352xf32> to vector<352xf32>
    %724 = vector.broadcast %721 : f32 to vector<352xf32>
    %725 = arith.mulf %724, %723 : vector<352xf32>
    %726 = arith.addf %720, %725 : vector<352xf32>
    %727 = arith.negf %726 : vector<352xf32>
    %728 = math.exp %727 : vector<352xf32>
    %cst_244 = arith.constant 1.000000e+00 : f32
    %729 = vector.broadcast %cst_244 : f32 to vector<352xf32>
    %730 = arith.addf %729, %728 : vector<352xf32>
    %731 = arith.divf %729, %730 : vector<352xf32>
    %c0_245 = arith.constant 0 : index
    %c0_246 = arith.constant 0 : index
    %c0_247 = arith.constant 0 : index
    %732 = vector.load %arg3[%c0_245, %c0_246, %c0_247] : memref<1x1x352xf32, #tpu.memory_space<vmem>>, vector<1x1x352xf32>
    %733 = vector.shape_cast %732 : vector<1x1x352xf32> to vector<352xf32>
    %734 = vector.shape_cast %731 : vector<352xf32> to vector<1x1x352xf32>
    tpu.vector_store %arg3[%c0_245, %c0_246, %c0_247], %734 {strides = array<i32>} : memref<1x1x352xf32, #tpu.memory_space<vmem>>, vector<1x1x352xf32>,
    return
  }
  func.func @transform_0(%arg0: i32) -> i32 {
    %c0_i32 = arith.constant 0 : i32
    %c0_i32_0 = arith.constant 0 : i32
    return %c0_i32 : i32
  }
  func.func @transform_1(%arg0: i32) -> (i32, i32, i32) {
    %c0_i32 = arith.constant 0 : i32
    %c0_i32_0 = arith.constant 0 : i32
    %c0_i32_1 = arith.constant 0 : i32
    return %arg0, %c0_i32, %c0_i32_0 : i32, i32, i32
  }
  func.func @transform_2(%arg0: i32) -> (i32, i32, i32) {
    %c0_i32 = arith.constant 0 : i32
    %c0_i32_0 = arith.constant 0 : i32
    %c0_i32_1 = arith.constant 0 : i32
    return %arg0, %c0_i32, %c0_i32_0 : i32, i32, i32
  }
}

</mosaic_0001>

<llo_original>
// kernel: tpu_custom_call.1
$region0: #{tpu_custom_call.1}
  #allocation0 [shape = 'u32[]', space=smem, size = 0x4, offset = 0x4, fixed_abs, tag = 'smem constant byte address 0x4 - core index']
  #allocation1 [shape = 'u32[144,128]{1,0:T(1,128)}', space=vmem, size = 0x12000, scoped, tag = 'internal scratch']
  #allocation2 [shape = 'f32[2,490]{1,0:T(2,128)}', space=vmem, size = 0x1000, scoped, tag = 'scratch operand']
  %s0 = inlined_call_operand.hbm [shape: f32[98], index: 0, kind: input, shape index: {}]
  %s1 = inlined_call_operand.hbm [shape: f32[2,4,256], index: 1, kind: input, shape index: {}]
  %s2 = inlined_call_operand.hbm [shape: f32[2,1,352], index: 2, kind: output, shape index: {}]
  %s3 = sld [smem:[#allocation0]]
  $region49: #{tpu_custom_call.1} parent=0
    _
  %s5 = ssub.s32 1, %s3
  %s6 = scalar_select 0, %s5, %s3
  $region1: #{tpu_custom_call.1} parent=0
    #allocation3 [shape = 'u8[512]{0}', space=smem, size = 0x200, scoped, tag = 'input window, operand 0, single buffered']
    #allocation4 [shape = 's32[2]{0}', space=sflag, size = 0x8, scoped, tag = 'scoped memory for tpu_custom_call.1']
    #allocation5 [shape = 's32[2]{0}', space=sflag, size = 0x8, scoped, tag = 'scoped memory for tpu_custom_call.1']
    #allocation6 [shape = 's32[2]{0}', space=sflag, size = 0x8, scoped, tag = 'scoped memory for tpu_custom_call.1']
    #allocation7 [shape = 'u8[8192]{0}', space=vmem, size = 0x2000, scoped, tag = 'input window, operand 1']
    #allocation8 [shape = 'u8[3072]{0}', space=vmem, size = 0xc00, scoped, tag = 'output window, operand 0']
    %7 = vsyncpa [#allocation6], 0
    %8 = vsyncpa [#allocation4], 0
    %s9 = scalar_lea.sflag [#allocation4], 1
    %10 = vsyncpa %s9, 0
    %11 = vsyncpa [#allocation5], 0
    %s12 = scalar_lea.sflag [#allocation5], 1
    %13 = vsyncpa %s12, 0
    loop: start=0, step=1, limit=4
    $region2: #{tpu_custom_call.1} parent=1 // loop_pre_header
      _
    $region3: #{tpu_custom_call.1} parent=1 // loop_header
      %s15 = sphi 0, %s19
      %p16 = scmp.ge.s32.totalorder %s15, 4
      %s23 = sphi 0, %s23
      %s25 = sphi 0, %s23
      %s26 = sphi 0, %s25
      %s40 = sphi 0, %s26
      %s46 = sphi 0, %s48
      %s49 = sphi 0, %s46
      %s50 = sphi 0, %s49
      %s66 = sphi 0, %s50
      %s72 = sphi 0, %s74
      %s75 = sphi 0, %s72
      %s76 = sphi 0, %s75
      %s92 = sphi 0, %s76
    $region4: #{tpu_custom_call.1} parent=1 // loop_header_branch
      %18 = sbr.rel (%p16) target = $region8
    $region5: #{tpu_custom_call.1} parent=1 // loop_body
      %s20 = ssub.s32 %s15, 1
      %s21 = ssub.s32 %s15, 2
      %s22 = sadd.s32 %s15, 1
      %s24 = sadd.s32 %s23, 1
      %p27 = scmp.eq.s32.totalorder %s15, 1
      %p28 = scmp.ne.s32.totalorder %s23, %s25
      %p29 = scmp.eq.s32.totalorder %s15, 0
      %p30 = por %p28, %p29
      %p31 = scmp.ne.s32.totalorder %s23, %s25
      %p32 = scmp.eq.s32.totalorder %s20, 1
      %p33 = por %p31, %p32
      %p34 = scmp.ne.s32.totalorder %s25, %s26
      %p35 = scmp.eq.s32.totalorder %s20, 0
      %p36 = por %p34, %p35
      %p37 = scmp.ne.s32.totalorder %s25, %s26
      %p38 = scmp.eq.s32.totalorder %s21, 1
      %p39 = por %p37, %p38
      %p41 = scmp.ne.s32.totalorder %s26, %s40
      %p42 = scmp.eq.s32.totalorder %s21, 0
      %p43 = por %p41, %p42
      %s44 = ssub.s32 %s15, %s22
      %p45 = scmp.eq.s32.totalorder %s44, 0
      %s47 = sadd.s32 %s46, 1
      %s48 = scalar_select %p45, %s46, %s47
      %p51 = pneg %p45
      %p52 = scmp.eq.s32.totalorder %s15, 1
      %p53 = por %p51, %p52
      %p54 = scmp.ne.s32.totalorder %s46, %s49
      %p55 = scmp.eq.s32.totalorder %s15, 0
      %p56 = por %p54, %p55
      %p57 = scmp.ne.s32.totalorder %s46, %s49
      %p58 = scmp.eq.s32.totalorder %s20, 1
      %p59 = por %p57, %p58
      %p60 = scmp.ne.s32.totalorder %s49, %s50
      %p61 = scmp.eq.s32.totalorder %s20, 0
      %p62 = por %p60, %p61
      %p63 = scmp.ne.s32.totalorder %s49, %s50
      %p64 = scmp.eq.s32.totalorder %s21, 1
      %p65 = por %p63, %p64
      %p67 = scmp.ne.s32.totalorder %s50, %s66
      %p68 = scmp.eq.s32.totalorder %s21, 0
      %p69 = por %p67, %p68
      %s70 = ssub.s32 %s15, %s22
      %p71 = scmp.eq.s32.totalorder %s70, 0
      %s73 = sadd.s32 %s72, 1
      %s74 = scalar_select %p71, %s72, %s73
      %p77 = pneg %p71
      %p78 = scmp.eq.s32.totalorder %s15, 1
      %p79 = por %p77, %p78
      %p80 = scmp.ne.s32.totalorder %s72, %s75
      %p81 = scmp.eq.s32.totalorder %s15, 0
      %p82 = por %p80, %p81
      %p83 = scmp.ne.s32.totalorder %s72, %s75
      %p84 = scmp.eq.s32.totalorder %s20, 1
      %p85 = por %p83, %p84
      %p86 = scmp.ne.s32.totalorder %s75, %s76
      %p87 = scmp.eq.s32.totalorder %s20, 0
      %p88 = por %p86, %p87
      %p89 = scmp.ne.s32.totalorder %s75, %s76
      %p90 = scmp.eq.s32.totalorder %s21, 1
      %p91 = por %p89, %p90
      %p93 = scmp.ne.s32.totalorder %s76, %s92
      %p94 = scmp.eq.s32.totalorder %s21, 0
      %p95 = por %p93, %p94
      %p96 = scmp.le.s32.totalorder 1, %s15
      %p97 = scmp.lt.s32.totalorder %s15, 3
      %p98 = pnand %p96, %p97
      %p99 = pneg %p98
      // Predicated region
      $region9: #{tpu_custom_call.1} parent=5 // pred_check
        _
      $region10: #{tpu_custom_call.1} parent=5 // pred_check_branch
        %101 = sbr.rel (%p98) target = $region12
      $region11: #{tpu_custom_call.1} parent=5 // pred_region
        %s102 = ssub.s32 %s15, 1
        // Predicated region
        $region13: #{tpu_custom_call.1} parent=11 // pred_check
          %p103 = pneg %p36
        $region14: #{tpu_custom_call.1} parent=11 // pred_check_branch
          %105 = sbr.rel (%p103) target = $region16
        $region15: #{tpu_custom_call.1} parent=11 // pred_region
          %s107 = ssub.s32 16, 16
          %108 = vsyncadd [#allocation6], %s107
          %111 = dma.hbm_to_smem %s0, 16, [#allocation3], [#allocation6]
        $region16: #{tpu_custom_call.1} parent=11 // pred_fallthru
          _
      $region12: #{tpu_custom_call.1} parent=5 // pred_fallthru
        _
      %p112 = scmp.lt.s32.totalorder %s15, 2
      // Predicated region
      $region17: #{tpu_custom_call.1} parent=5 // pred_check
        %p113 = pneg %p112
      $region18: #{tpu_custom_call.1} parent=5 // pred_check_branch
        %115 = sbr.rel (%p113) target = $region20
      $region19: #{tpu_custom_call.1} parent=5 // pred_region
        // Predicated region
        $region21: #{tpu_custom_call.1} parent=19 // pred_check
          %p116 = pneg %p56
        $region22: #{tpu_custom_call.1} parent=19 // pred_check_branch
          %118 = sbr.rel (%p116) target = $region24
        $region23: #{tpu_custom_call.1} parent=19 // pred_region
          %s119 = sand.u32 %s46, 1
          %s120 = scalar_lea.sflag [#allocation4], %s119
          %s121 = sand.u32 %s46, 1
          %s122 = smul.addr %s121, 8
          %s123 = scalar_lea.vmem [#allocation7], %s122
          %s125 = ssub.s32 128, 128
          %126 = vsyncadd %s120, %s125
          %s127 = smul.addr %s15, 2
          %s128 = smul.addr %s127, 64
          %s129 = scalar_lea.hbm %s1, %s128
          %s131 = sshll.u32 %s123, 4
          %s132 = int_to_ptr.vmem [resolvable:$true] %s131
          %134 = dma.hbm_to_vmem [thread:$0]  %s129, 128, %s132, %s120
        $region24: #{tpu_custom_call.1} parent=19 // pred_fallthru
          _
      $region20: #{tpu_custom_call.1} parent=5 // pred_fallthru
        _
      %p135 = scmp.le.s32.totalorder 1, %s15
      %p136 = scmp.lt.s32.totalorder %s15, 3
      %p137 = pnand %p135, %p136
      %p138 = pneg %p137
      // Predicated region
      $region25: #{tpu_custom_call.1} parent=5 // pred_check
        _
      $region26: #{tpu_custom_call.1} parent=5 // pred_check_branch
        %140 = sbr.rel (%p137) target = $region28
      $region27: #{tpu_custom_call.1} parent=5 // pred_region
        %s141 = ssub.s32 %s15, 1
        // Predicated region
        $region29: #{tpu_custom_call.1} parent=27 // pred_check
          %p142 = pneg %p36
        $region30: #{tpu_custom_call.1} parent=27 // pred_check_branch
          %144 = sbr.rel (%p142) target = $region32
        $region31: #{tpu_custom_call.1} parent=27 // pred_region
          %145 = dma.done [#allocation6], 16
        $region32: #{tpu_custom_call.1} parent=27 // pred_fallthru
          _
        %s146 = sand.u32 %s49, 1
        %s147 = scalar_lea.sflag [#allocation4], %s146
        %s148 = sand.u32 %s49, 1
        %s149 = smul.addr %s148, 8
        %s150 = scalar_lea.vmem [#allocation7], %s149
        // Predicated region
        $region33: #{tpu_custom_call.1} parent=27 // pred_check
          %p151 = pneg %p62
        $region34: #{tpu_custom_call.1} parent=27 // pred_check_branch
          %153 = sbr.rel (%p151) target = $region36
        $region35: #{tpu_custom_call.1} parent=27 // pred_region
          %154 = dma.done %s147, 128
        $region36: #{tpu_custom_call.1} parent=27 // pred_fallthru
          _
        %155 = sfence
        %p156 = pneg %p36
        %p157 = pneg %p33
        %s158 = sand.u32 %s49, 1
        %s159 = scalar_lea.sflag [#allocation4], %s158
        %s160 = sand.u32 %s49, 1
        %s161 = smul.addr %s160, 8
        %s162 = scalar_lea.vmem [#allocation7], %s161
        %p163 = pneg %p62
        %p164 = pneg %p59
        %p165 = pneg %p88
        %p166 = pneg %p85
        %s167 = sand.u32 %s75, 1
        %s168 = scalar_lea.sflag [#allocation5], %s167
        %s169 = sand.u32 %s75, 1
        %s170 = smul.addr %s169, 3
        %s171 = scalar_lea.vmem [#allocation8], %s170
        %vm172 = vcmask 1041408
        %vm173 = vcmask 1043458
        %vm174 = vmor %vm173, %vm172
        %vm175 = vcmask 1045508
        %vm176 = vmor %vm175, %vm174
        %vm177 = vcmask 867334
        %vm178 = vmor %vm177, %vm176
        %179 = vst.msk [vmem:[#allocation2] sm:$0xff] %vm178, 0.0
        %v180 = vld [vmem:[%s150] sm:$0xff]
        %v181 = vadd.f32 %v180, 0.0
        %v183 = vcombine.high %v181, %v181
        %vm185 = vcmask 1043456
        %v186 = vsel %vm185, %v181, 0.0
        %v187 = vrot.slane %v186, 4
        %v188 = vadd.f32 %v186, %v187
        %v189 = vrot.slane %v188, 2
        %v190 = vadd.f32 %v188, %v189
        %v191 = vrot.slane %v190, 1
        %v192 = vadd.f32 %v190, %v191
        %v193 = vsel %vm185, %v183, 0.0
        %v194 = vrot.slane %v193, 4
        %v195 = vadd.f32 %v193, %v194
        %v196 = vrot.slane %v195, 2
        %v197 = vadd.f32 %v195, %v196
        %v198 = vrot.slane %v197, 1
        %v199 = vadd.f32 %v197, %v198
        %v201 = vcombine.high %v180, %v180
        %v203 = vsel %vm185, %v180, -inf
        %v204 = vrot.slane %v203, 4
        %v205 = vmax.f32 %v203, %v204
        %v206 = vrot.slane %v205, 2
        %v207 = vmax.f32 %v205, %v206
        %v208 = vrot.slane %v207, 1
        %v209 = vmax.f32 %v207, %v208
        %v210 = vsel %vm185, %v201, -inf
        %v211 = vrot.slane %v210, 4
        %v212 = vmax.f32 %v210, %v211
        %v213 = vrot.slane %v212, 2
        %v214 = vmax.f32 %v212, %v213
        %v215 = vrot.slane %v214, 1
        %v216 = vmax.f32 %v214, %v215
        %v219 = vunpack.c.l.s4 1983009808
        %v220 = vunpack.c.0.s8 %v219
        %v221 = vlaneseq
        %v222 = vshrl.u32 %v221, 7
        %v223 = vsub.s32 %v220, %v222
        %v224 = vrot.slane %v192, %v223
        %225 = vrot.lane.b32.xlu0 %v224, 69
        %v226 = vpop.permute.xlu0 %225
        %vm228 = vcmask 688680
        %229 = vst.msk [vmem:[#allocation2] sm:$0x1] %vm228, %v226
        %v232 = vunpack.c.l.s4 1983009808
        %v233 = vunpack.c.0.s8 %v232
        %v234 = vlaneseq
        %v235 = vshrl.u32 %v234, 7
        %v236 = vsub.s32 %v233, %v235
        %v237 = vrot.slane %v209, %v236
        %238 = vrot.lane.b32.xlu0 %v237, 69
        %v239 = vpop.permute.xlu0 %238
        %241 = vst.msk [vmem:[#allocation2 + $0x1] sm:$0x1] %vm228, %v239
        %242 = vrot.lane.b32.xlu0 %v224, 75
        %v243 = vpop.permute.xlu0 %242
        %vm245 = vcmask 869080
        %246 = vst.msk [vmem:[#allocation2] sm:$0x1] %vm245, %v243
        %247 = vrot.lane.b32.xlu0 %v237, 75
        %v248 = vpop.permute.xlu0 %247
        %250 = vst.msk [vmem:[#allocation2 + $0x1] sm:$0x1] %vm245, %v248
        %251 = vrot.lane.b32.xlu0 %v224, 81
        %v252 = vpop.permute.xlu0 %251
        %v253 = vrot.slane %v252, 6
        %vm254 = vcmask 662528
        %v255 = vsel %vm254, %v253, %v252
        %vm257 = vcmask 1041288
        %vm258 = vcmask 2050
        %vm259 = vmor %vm258, %vm257
        %260 = vst.msk [vmem:[#allocation2] sm:$0x5] %vm259, %v255
        %261 = vrot.lane.b32.xlu0 %v237, 81
        %v262 = vpop.permute.xlu0 %261
        %v263 = vrot.slane %v262, 6
        %v264 = vsel %vm254, %v263, %v262
        %266 = vst.msk [vmem:[#allocation2 + $0x1] sm:$0x5] %vm259, %v264
        %267 = vrot.lane.b32.xlu0 %v224, 87
        %v268 = vpop.permute.xlu0 %267
        %vm270 = vcmask 180280
        %271 = vst.msk [vmem:[#allocation2 + $0x2] sm:$0x1] %vm270, %v268
        %272 = vrot.lane.b32.xlu0 %v237, 87
        %v273 = vpop.permute.xlu0 %272
        %275 = vst.msk [vmem:[#allocation2 + $0x3] sm:$0x1] %vm270, %v273
        %276 = vrot.lane.b32.xlu0 %v224, 93
        %v277 = vpop.permute.xlu0 %276
        %vm279 = vcmask 360680
        %280 = vst.msk [vmem:[#allocation2 + $0x2] sm:$0x1] %vm279, %v277
        %281 = vrot.lane.b32.xlu0 %v237, 93
        %v282 = vpop.permute.xlu0 %281
        %284 = vst.msk [vmem:[#allocation2 + $0x3] sm:$0x1] %vm279, %v282
        %285 = vrot.lane.b32.xlu0 %v224, 99
        %v286 = vpop.permute.xlu0 %285
        %vm288 = vcmask 541080
        %289 = vst.msk [vmem:[#allocation2 + $0x2] sm:$0x1] %vm288, %v286
        %290 = vrot.lane.b32.xlu0 %v237, 99
        %v291 = vpop.permute.xlu0 %290
        %293 = vst.msk [vmem:[#allocation2 + $0x3] sm:$0x1] %vm288, %v291
        %294 = vrot.lane.b32.xlu0 %v224, 105
        %v295 = vpop.permute.xlu0 %294
        %vm297 = vcmask 721480
        %298 = vst.msk [vmem:[#allocation2 + $0x2] sm:$0x1] %vm297, %v295
        %299 = vrot.lane.b32.xlu0 %v237, 105
        %v300 = vpop.permute.xlu0 %299
        %302 = vst.msk [vmem:[#allocation2 + $0x3] sm:$0x1] %vm297, %v300
        %303 = vrot.lane.b32.xlu0 %v224, 111
        %v304 = vpop.permute.xlu0 %303
        %vm306 = vcmask 901880
        %307 = vst.msk [vmem:[#allocation2 + $0x2] sm:$0x1] %vm306, %v304
        %308 = vrot.lane.b32.xlu0 %v237, 111
        %v309 = vpop.permute.xlu0 %308
        %311 = vst.msk [vmem:[#allocation2 + $0x3] sm:$0x1] %vm306, %v309
        %v314 = vunpack.c.l.s4 1983009808
        %v315 = vunpack.c.0.s8 %v314
        %v316 = vlaneseq
        %v317 = vshrl.u32 %v316, 7
        %v318 = vsub.s32 %v315, %v317
        %v319 = vrot.slane %v199, %v318
        %320 = vrot.lane.b32.xlu0 %v319, 117
        %v321 = vpop.permute.xlu0 %320
        %v322 = vrot.slane %v321, 6
        %vm323 = vcmask 957440
        %v324 = vsel %vm323, %v322, %v321
        %vm326 = vcmask 1041320
        %vm327 = vcmask 34818
        %vm328 = vmor %vm327, %vm326
        %329 = vst.msk [vmem:[#allocation2 + $0x2] sm:$0x5] %vm328, %v324
        %v332 = vunpack.c.l.s4 1983009808
        %v333 = vunpack.c.0.s8 %v332
        %v334 = vlaneseq
        %v335 = vshrl.u32 %v334, 7
        %v336 = vsub.s32 %v333, %v335
        %v337 = vrot.slane %v216, %v336
        %338 = vrot.lane.b32.xlu0 %v337, 117
        %v339 = vpop.permute.xlu0 %338
        %v340 = vrot.slane %v339, 6
        %v341 = vsel %vm323, %v340, %v339
        %343 = vst.msk [vmem:[#allocation2 + $0x3] sm:$0x5] %vm328, %v341
        %344 = vrot.lane.b32.xlu0 %v319, 123
        %v345 = vpop.permute.xlu0 %344
        %vm347 = vcmask 213080
        %348 = vst.msk [vmem:[#allocation2 + $0x4] sm:$0x1] %vm347, %v345
        %349 = vrot.lane.b32.xlu0 %v337, 123
        %v350 = vpop.permute.xlu0 %349
        %352 = vst.msk [vmem:[#allocation2 + $0x5] sm:$0x1] %vm347, %v350
        %353 = vrot.lane.b32.xlu0 %v319, 1
        %v354 = vpop.permute.xlu0 %353
        %vm356 = vcmask 393480
        %357 = vst.msk [vmem:[#allocation2 + $0x4] sm:$0x1] %vm356, %v354
        %358 = vrot.lane.b32.xlu0 %v337, 1
        %v359 = vpop.permute.xlu0 %358
        %361 = vst.msk [vmem:[#allocation2 + $0x5] sm:$0x1] %vm356, %v359
        %362 = vrot.lane.b32.xlu0 %v319, 7
        %v363 = vpop.permute.xlu0 %362
        %vm365 = vcmask 573880
        %366 = vst.msk [vmem:[#allocation2 + $0x4] sm:$0x1] %vm365, %v363
        %367 = vrot.lane.b32.xlu0 %v337, 7
        %v368 = vpop.permute.xlu0 %367
        %370 = vst.msk [vmem:[#allocation2 + $0x5] sm:$0x1] %vm365, %v368
        %371 = vrot.lane.b32.xlu0 %v319, 13
        %v372 = vpop.permute.xlu0 %371
        %vm374 = vcmask 754280
        %375 = vst.msk [vmem:[#allocation2 + $0x4] sm:$0x1] %vm374, %v372
        %376 = vrot.lane.b32.xlu0 %v337, 13
        %v377 = vpop.permute.xlu0 %376
        %379 = vst.msk [vmem:[#allocation2 + $0x5] sm:$0x1] %vm374, %v377
        %380 = vrot.lane.b32.xlu0 %v319, 19
        %v381 = vpop.permute.xlu0 %380
        %vm383 = vcmask 934680
        %384 = vst.msk [vmem:[#allocation2 + $0x4] sm:$0x1] %vm383, %v381
        %385 = vrot.lane.b32.xlu0 %v337, 19
        %v386 = vpop.permute.xlu0 %385
        %388 = vst.msk [vmem:[#allocation2 + $0x5] sm:$0x1] %vm383, %v386
        %389 = vrot.lane.b32.xlu0 %v319, 25
        %v390 = vpop.permute.xlu0 %389
        %v391 = vrot.slane %v390, 6
        %vm392 = vcmask 203776
        %v393 = vsel %vm392, %v391, %v390
        %vm395 = vcmask 1041352
        %vm396 = vcmask 67586
        %vm397 = vmor %vm396, %vm395
        %398 = vst.msk [vmem:[#allocation2 + $0x4] sm:$0x5] %vm397, %v393
        %399 = vrot.lane.b32.xlu0 %v337, 25
        %v400 = vpop.permute.xlu0 %399
        %v401 = vrot.slane %v400, 6
        %v402 = vsel %vm392, %v401, %v400
        %404 = vst.msk [vmem:[#allocation2 + $0x5] sm:$0x5] %vm397, %v402
        %405 = vrot.lane.b32.xlu0 %v319, 31
        %v406 = vpop.permute.xlu0 %405
        %vm408 = vcmask 245880
        %409 = vst.msk [vmem:[#allocation2 + $0x6] sm:$0x1] %vm408, %v406
        %410 = vrot.lane.b32.xlu0 %v337, 31
        %v411 = vpop.permute.xlu0 %410
        %413 = vst.msk [vmem:[#allocation2 + $0x7] sm:$0x1] %vm408, %v411
        %s414 = sld [smem:[#allocation3]]
        %v415 = vld [vmem:[#allocation2] ss:$2 sm:$0x7]
        %v416 = vstv %s414
        %v417 = vmul.f32 %v416, %v415
        %v418 = vadd.f32 %v417, 0.0
        %s419 = sld [smem:[#allocation3 + $0x1]]
        %v420 = vstv %s419
        %v421 = vmul.f32 %v420, %v415
        %423 = vrot.lane.b32.xlu0 %v421, 127
        %v424 = vpop.permute.xlu0 %423
        %v425 = vrot.slane %v424, 1
        %vm426 = vcmask 1039360
        %v427 = vsel %vm426, %v424, %v425
        %v429 = vadd.f32 %v418, %v427
        %s430 = sld [smem:[#allocation3 + $0x2]]
        %v431 = vstv %s430
        %v432 = vmul.f32 %v431, %v415
        %434 = vrot.lane.b32.xlu0 %v432, 126
        %v435 = vpop.permute.xlu0 %434
        %v436 = vrot.slane %v435, 1
        %vm437 = vcmask 1031168
        %v438 = vsel %vm437, %v435, %v436
        %v440 = vadd.f32 %v429, %v438
        %s441 = sld [smem:[#allocation3 + $0x3]]
        %v442 = vstv %s441
        %v443 = vmul.f32 %v442, %v415
        %445 = vrot.lane.b32.xlu0 %v443, 125
        %v446 = vpop.permute.xlu0 %445
        %v447 = vrot.slane %v446, 1
        %vm448 = vcmask 1022976
        %v449 = vsel %vm448, %v446, %v447
        %v451 = vadd.f32 %v440, %v449
        %s452 = sld [smem:[#allocation3 + $0x4]]
        %v453 = vstv %s452
        %v454 = vmul.f32 %v453, %v415
        %456 = vrot.lane.b32.xlu0 %v454, 124
        %v457 = vpop.permute.xlu0 %456
        %v458 = vrot.slane %v457, 1
        %vm459 = vcmask 1014784
        %v460 = vsel %vm459, %v457, %v458
        %v462 = vadd.f32 %v451, %v460
        %s463 = sld [smem:[#allocation3 + $0x5]]
        %v464 = vstv %s463
        %v465 = vmul.f32 %v464, %v415
        %467 = vrot.lane.b32.xlu0 %v465, 123
        %v468 = vpop.permute.xlu0 %467
        %v469 = vrot.slane %v468, 1
        %vm470 = vcmask 1006592
        %v471 = vsel %vm470, %v468, %v469
        %v473 = vadd.f32 %v462, %v471
        %s474 = sld [smem:[#allocation3 + $0x6]]
        %v475 = vstv %s474
        %v476 = vmul.f32 %v475, %v415
        %478 = vrot.lane.b32.xlu0 %v476, 122
        %v479 = vpop.permute.xlu0 %478
        %v480 = vrot.slane %v479, 1
        %vm481 = vcmask 998400
        %v482 = vsel %vm481, %v479, %v480
        %v484 = vadd.f32 %v473, %v482
        %s485 = sld [smem:[#allocation3 + $0x7]]
        %v486 = vstv %s485
        %v487 = vmul.f32 %v486, %v415
        %489 = vrot.lane.b32.xlu0 %v487, 106
        %v490 = vpop.permute.xlu0 %489
        %v491 = vrot.slane %v490, 1
        %vm492 = vcmask 867328
        %v493 = vsel %vm492, %v490, %v491
        %v495 = vadd.f32 %v484, %v493
        %s496 = sld [smem:[#allocation3 + $0x8]]
        %v497 = vstv %s496
        %v498 = vmul.f32 %v497, %v415
        %500 = vrot.lane.b32.xlu0 %v498, 105
        %v501 = vpop.permute.xlu0 %500
        %v502 = vrot.slane %v501, 1
        %vm503 = vcmask 859136
        %v504 = vsel %vm503, %v501, %v502
        %v506 = vadd.f32 %v495, %v504
        %s507 = sld [smem:[#allocation3 + $0x9]]
        %v508 = vstv %s507
        %v509 = vmul.f32 %v508, %v415
        %511 = vrot.lane.b32.xlu0 %v509, 104
        %v512 = vpop.permute.xlu0 %511
        %v513 = vrot.slane %v512, 1
        %vm514 = vcmask 850944
        %v515 = vsel %vm514, %v512, %v513
        %v517 = vadd.f32 %v506, %v515
        %s518 = sld [smem:[#allocation3 + $0xa]]
        %v519 = vstv %s518
        %v520 = vmul.f32 %v519, %v415
        %522 = vrot.lane.b32.xlu0 %v520, 103
        %v523 = vpop.permute.xlu0 %522
        %v524 = vrot.slane %v523, 1
        %vm525 = vcmask 842752
        %v526 = vsel %vm525, %v523, %v524
        %v528 = vadd.f32 %v517, %v526
        %s529 = sld [smem:[#allocation3 + $0xb]]
        %v530 = vstv %s529
        %v531 = vmul.f32 %v530, %v415
        %533 = vrot.lane.b32.xlu0 %v531, 102
        %v534 = vpop.permute.xlu0 %533
        %v535 = vrot.slane %v534, 1
        %vm536 = vcmask 834560
        %v537 = vsel %vm536, %v534, %v535
        %v539 = vadd.f32 %v528, %v537
        %s540 = sld [smem:[#allocation3 + $0xc]]
        %v541 = vstv %s540
        %v542 = vmul.f32 %v541, %v415
        %544 = vrot.lane.b32.xlu0 %v542, 101
        %v545 = vpop.permute.xlu0 %544
        %v546 = vrot.slane %v545, 1
        %vm547 = vcmask 826368
        %v548 = vsel %vm547, %v545, %v546
        %v550 = vadd.f32 %v539, %v548
        %s551 = sld [smem:[#allocation3 + $0xd]]
        %v552 = vstv %s551
        %v553 = vmul.f32 %v552, %v415
        %555 = vrot.lane.b32.xlu0 %v553, 100
        %v556 = vpop.permute.xlu0 %555
        %v557 = vrot.slane %v556, 1
        %vm558 = vcmask 818176
        %v559 = vsel %vm558, %v556, %v557
        %v561 = vadd.f32 %v550, %v559
        %s562 = sld [smem:[#allocation3 + $0xe]]
        %v563 = vld [vmem:[#allocation2] ss:$2 sm:$0xf]
        %v564 = vstv %s562
        %v565 = vmul.f32 %v564, %v563
        %567 = vrot.lane.b32.xlu0 %v565, 84
        %v568 = vpop.permute.xlu0 %567
        %v569 = vrot.slane %v568, 1
        %vm570 = vcmask 687104
        %v571 = vsel %vm570, %v568, %v569
        %v573 = vadd.f32 %v561, %v571
        %s574 = sld [smem:[#allocation3 + $0xf]]
        %v575 = vstv %s574
        %v576 = vmul.f32 %v575, %v563
        %578 = vrot.lane.b32.xlu0 %v576, 83
        %v579 = vpop.permute.xlu0 %578
        %v580 = vrot.slane %v579, 1
        %vm581 = vcmask 678912
        %v582 = vsel %vm581, %v579, %v580
        %v584 = vadd.f32 %v573, %v582
        %s585 = sld [smem:[#allocation3 + $0x10]]
        %v586 = vstv %s585
        %v587 = vmul.f32 %v586, %v563
        %589 = vrot.lane.b32.xlu0 %v587, 82
        %v590 = vpop.permute.xlu0 %589
        %v591 = vrot.slane %v590, 1
        %vm592 = vcmask 670720
        %v593 = vsel %vm592, %v590, %v591
        %v595 = vadd.f32 %v584, %v593
        %s596 = sld [smem:[#allocation3 + $0x11]]
        %v597 = vstv %s596
        %v598 = vmul.f32 %v597, %v563
        %600 = vrot.lane.b32.xlu0 %v598, 81
        %v601 = vpop.permute.xlu0 %600
        %v602 = vrot.slane %v601, 1
        %v603 = vsel %vm254, %v601, %v602
        %v605 = vadd.f32 %v595, %v603
        %s606 = sld [smem:[#allocation3 + $0x12]]
        %v607 = vstv %s606
        %v608 = vmul.f32 %v607, %v563
        %610 = vrot.lane.b32.xlu0 %v608, 80
        %v611 = vpop.permute.xlu0 %610
        %v612 = vrot.slane %v611, 1
        %vm613 = vcmask 654336
        %v614 = vsel %vm613, %v611, %v612
        %v616 = vadd.f32 %v605, %v614
        %s617 = sld [smem:[#allocation3 + $0x13]]
        %v618 = vstv %s617
        %v619 = vmul.f32 %v618, %v563
        %621 = vrot.lane.b32.xlu0 %v619, 79
        %v622 = vpop.permute.xlu0 %621
        %v623 = vrot.slane %v622, 1
        %vm624 = vcmask 646144
        %v625 = vsel %vm624, %v622, %v623
        %v627 = vadd.f32 %v616, %v625
        %s628 = sld [smem:[#allocation3 + $0x14]]
        %v629 = vstv %s628
        %v630 = vmul.f32 %v629, %v563
        %632 = vrot.lane.b32.xlu0 %v630, 78
        %v633 = vpop.permute.xlu0 %632
        %v634 = vrot.slane %v633, 1
        %vm635 = vcmask 637952
        %v636 = vsel %vm635, %v633, %v634
        %v638 = vadd.f32 %v627, %v636
        %s639 = sld [smem:[#allocation3 + $0x15]]
        %v640 = vstv %s639
        %v641 = vmul.f32 %v640, %v563
        %643 = vrot.lane.b32.xlu0 %v641, 62
        %v644 = vpop.permute.xlu0 %643
        %v645 = vrot.slane %v644, 1
        %vm646 = vcmask 506880
        %v647 = vsel %vm646, %v644, %v645
        %v649 = vadd.f32 %v638, %v647
        %s650 = sld [smem:[#allocation3 + $0x16]]
        %v651 = vstv %s650
        %v652 = vmul.f32 %v651, %v563
        %654 = vrot.lane.b32.xlu0 %v652, 61
        %v655 = vpop.permute.xlu0 %654
        %v656 = vrot.slane %v655, 1
        %vm657 = vcmask 498688
        %v658 = vsel %vm657, %v655, %v656
        %v660 = vadd.f32 %v649, %v658
        %s661 = sld [smem:[#allocation3 + $0x17]]
        %v662 = vstv %s661
        %v663 = vmul.f32 %v662, %v563
        %665 = vrot.lane.b32.xlu0 %v663, 60
        %v666 = vpop.permute.xlu0 %665
        %v667 = vrot.slane %v666, 1
        %vm668 = vcmask 490496
        %v669 = vsel %vm668, %v666, %v667
        %v671 = vadd.f32 %v660, %v669
        %s672 = sld [smem:[#allocation3 + $0x18]]
        %v673 = vstv %s672
        %v674 = vmul.f32 %v673, %v563
        %676 = vrot.lane.b32.xlu0 %v674, 59
        %v677 = vpop.permute.xlu0 %676
        %v678 = vrot.slane %v677, 1
        %vm679 = vcmask 482304
        %v680 = vsel %vm679, %v677, %v678
        %v682 = vadd.f32 %v671, %v680
        %s683 = sld [smem:[#allocation3 + $0x19]]
        %v684 = vstv %s683
        %v685 = vmul.f32 %v684, %v563
        %687 = vrot.lane.b32.xlu0 %v685, 58
        %v688 = vpop.permute.xlu0 %687
        %v689 = vrot.slane %v688, 1
        %vm690 = vcmask 474112
        %v691 = vsel %vm690, %v688, %v689
        %v693 = vadd.f32 %v682, %v691
        %s694 = sld [smem:[#allocation3 + $0x1a]]
        %v695 = vstv %s694
        %v696 = vmul.f32 %v695, %v563
        %698 = vrot.lane.b32.xlu0 %v696, 57
        %v699 = vpop.permute.xlu0 %698
        %v700 = vrot.slane %v699, 1
        %vm701 = vcmask 465920
        %v702 = vsel %vm701, %v699, %v700
        %v704 = vadd.f32 %v693, %v702
        %s705 = sld [smem:[#allocation3 + $0x1b]]
        %v706 = vstv %s705
        %v707 = vmul.f32 %v706, %v563
        %709 = vrot.lane.b32.xlu0 %v707, 56
        %v710 = vpop.permute.xlu0 %709
        %v711 = vrot.slane %v710, 1
        %vm712 = vcmask 457728
        %v713 = vsel %vm712, %v710, %v711
        %v715 = vadd.f32 %v704, %v713
        %s716 = sld [smem:[#allocation3 + $0x1c]]
        %v717 = vstv %s716
        %v718 = vmul.f32 %v717, %v563
        %720 = vrot.lane.b32.xlu0 %v718, 40
        %v721 = vpop.permute.xlu0 %720
        %v722 = vrot.slane %v721, 1
        %vm723 = vcmask 326656
        %v724 = vsel %vm723, %v721, %v722
        %v726 = vadd.f32 %v715, %v724
        %s727 = sld [smem:[#allocation3 + $0x1d]]
        %v728 = vstv %s727
        %v729 = vmul.f32 %v728, %v563
        %731 = vrot.lane.b32.xlu0 %v729, 39
        %v732 = vpop.permute.xlu0 %731
        %v733 = vrot.slane %v732, 1
        %vm734 = vcmask 318464
        %v735 = vsel %vm734, %v732, %v733
        %v737 = vadd.f32 %v726, %v735
        %s738 = sld [smem:[#allocation3 + $0x1e]]
        %v739 = vstv %s738
        %v740 = vmul.f32 %v739, %v563
        %742 = vrot.lane.b32.xlu0 %v740, 38
        %v743 = vpop.permute.xlu0 %742
        %v744 = vrot.slane %v743, 1
        %vm745 = vcmask 310272
        %v746 = vsel %vm745, %v743, %v744
        %v748 = vadd.f32 %v737, %v746
        %s749 = sld [smem:[#allocation3 + $0x1f]]
        %v750 = vstv %s749
        %v751 = vmul.f32 %v750, %v563
        %753 = vrot.lane.b32.xlu0 %v751, 37
        %v754 = vpop.permute.xlu0 %753
        %v755 = vrot.slane %v754, 1
        %vm756 = vcmask 302080
        %v757 = vsel %vm756, %v754, %v755
        %v759 = vadd.f32 %v748, %v757
        %s760 = sld [smem:[#allocation3 + $0x20]]
        %v761 = vstv %s760
        %v762 = vmul.f32 %v761, %v563
        %764 = vrot.lane.b32.xlu0 %v762, 36
        %v765 = vpop.permute.xlu0 %764
        %v766 = vrot.slane %v765, 1
        %vm767 = vcmask 293888
        %v768 = vsel %vm767, %v765, %v766
        %v770 = vadd.f32 %v759, %v768
        %s771 = sld [smem:[#allocation3 + $0x21]]
        %v772 = vstv %s771
        %v773 = vmul.f32 %v772, %v563
        %775 = vrot.lane.b32.xlu0 %v773, 35
        %v776 = vpop.permute.xlu0 %775
        %v777 = vrot.slane %v776, 1
        %vm778 = vcmask 285696
        %v779 = vsel %vm778, %v776, %v777
        %v781 = vadd.f32 %v770, %v779
        %s782 = sld [smem:[#allocation3 + $0x22]]
        %v783 = vstv %s782
        %v784 = vmul.f32 %v783, %v563
        %786 = vrot.lane.b32.xlu0 %v784, 34
        %v787 = vpop.permute.xlu0 %786
        %v788 = vrot.slane %v787, 1
        %vm789 = vcmask 277504
        %v790 = vsel %vm789, %v787, %v788
        %v792 = vadd.f32 %v781, %v790
        %s793 = sld [smem:[#allocation3 + $0x23]]
        %v794 = vstv %s793
        %v795 = vmul.f32 %v794, %v563
        %797 = vrot.lane.b32.xlu0 %v795, 18
        %v798 = vpop.permute.xlu0 %797
        %v799 = vrot.slane %v798, 1
        %vm800 = vcmask 146432
        %v801 = vsel %vm800, %v798, %v799
        %v803 = vadd.f32 %v792, %v801
        %s804 = sld [smem:[#allocation3 + $0x24]]
        %v805 = vstv %s804
        %v806 = vmul.f32 %v805, %v563
        %808 = vrot.lane.b32.xlu0 %v806, 17
        %v809 = vpop.permute.xlu0 %808
        %v810 = vrot.slane %v809, 1
        %vm811 = vcmask 138240
        %v812 = vsel %vm811, %v809, %v810
        %v814 = vadd.f32 %v803, %v812
        %s815 = sld [smem:[#allocation3 + $0x25]]
        %v816 = vstv %s815
        %v817 = vmul.f32 %v816, %v563
        %819 = vrot.lane.b32.xlu0 %v817, 16
        %v820 = vpop.permute.xlu0 %819
        %v821 = vrot.slane %v820, 1
        %vm822 = vcmask 130048
        %v823 = vsel %vm822, %v820, %v821
        %v825 = vadd.f32 %v814, %v823
        %s826 = sld [smem:[#allocation3 + $0x26]]
        %v827 = vstv %s826
        %v828 = vmul.f32 %v827, %v563
        %830 = vrot.lane.b32.xlu0 %v828, 15
        %v831 = vpop.permute.xlu0 %830
        %v832 = vrot.slane %v831, 1
        %vm833 = vcmask 121856
        %v834 = vsel %vm833, %v831, %v832
        %v836 = vadd.f32 %v825, %v834
        %s837 = sld [smem:[#allocation3 + $0x27]]
        %v838 = vstv %s837
        %v839 = vmul.f32 %v838, %v563
        %841 = vrot.lane.b32.xlu0 %v839, 14
        %v842 = vpop.permute.xlu0 %841
        %v843 = vrot.slane %v842, 1
        %vm844 = vcmask 113664
        %v845 = vsel %vm844, %v842, %v843
        %v847 = vadd.f32 %v836, %v845
        %s848 = sld [smem:[#allocation3 + $0x28]]
        %v849 = vstv %s848
        %v850 = vmul.f32 %v849, %v563
        %852 = vrot.lane.b32.xlu0 %v850, 13
        %v853 = vpop.permute.xlu0 %852
        %v854 = vrot.slane %v853, 1
        %vm855 = vcmask 105472
        %v856 = vsel %vm855, %v853, %v854
        %v858 = vadd.f32 %v847, %v856
        %s859 = sld [smem:[#allocation3 + $0x29]]
        %v860 = vstv %s859
        %v861 = vmul.f32 %v860, %v563
        %863 = vrot.lane.b32.xlu0 %v861, 12
        %v864 = vpop.permute.xlu0 %863
        %v865 = vrot.slane %v864, 1
        %vm866 = vcmask 97280
        %v867 = vsel %vm866, %v864, %v865
        %v869 = vadd.f32 %v858, %v867
        %s870 = sld [smem:[#allocation3 + $0x2a]]
        %s871 = scalar_lea.vmem [#allocation2], 2
        %v872 = vld [vmem:[%s871] ss:$2 sm:$0x7]
        %v873 = vstv %s870
        %v874 = vmul.f32 %v873, %v872
        %876 = vrot.lane.b32.xlu0 %v874, 124
        %v877 = vpop.permute.xlu0 %876
        %v878 = vrot.slane %v877, 1
        %v879 = vsel %vm459, %v877, %v878
        %v881 = vadd.f32 %v869, %v879
        %s882 = sld [smem:[#allocation3 + $0x2b]]
        %v883 = vstv %s882
        %v884 = vmul.f32 %v883, %v872
        %886 = vrot.lane.b32.xlu0 %v884, 123
        %v887 = vpop.permute.xlu0 %886
        %v888 = vrot.slane %v887, 1
        %v889 = vsel %vm470, %v887, %v888
        %v891 = vadd.f32 %v881, %v889
        %s892 = sld [smem:[#allocation3 + $0x2c]]
        %v893 = vstv %s892
        %v894 = vmul.f32 %v893, %v872
        %896 = vrot.lane.b32.xlu0 %v894, 122
        %v897 = vpop.permute.xlu0 %896
        %v898 = vrot.slane %v897, 1
        %v899 = vsel %vm481, %v897, %v898
        %v901 = vadd.f32 %v891, %v899
        %s902 = sld [smem:[#allocation3 + $0x2d]]
        %v903 = vstv %s902
        %v904 = vmul.f32 %v903, %v872
        %906 = vrot.lane.b32.xlu0 %v904, 121
        %v907 = vpop.permute.xlu0 %906
        %v908 = vrot.slane %v907, 1
        %vm909 = vcmask 990208
        %v910 = vsel %vm909, %v907, %v908
        %v912 = vadd.f32 %v901, %v910
        %s913 = sld [smem:[#allocation3 + $0x2e]]
        %v914 = vstv %s913
        %v915 = vmul.f32 %v914, %v872
        %917 = vrot.lane.b32.xlu0 %v915, 120
        %v918 = vpop.permute.xlu0 %917
        %v919 = vrot.slane %v918, 1
        %vm920 = vcmask 982016
        %v921 = vsel %vm920, %v918, %v919
        %v923 = vadd.f32 %v912, %v921
        %s924 = sld [smem:[#allocation3 + $0x2f]]
        %v925 = vstv %s924
        %v926 = vmul.f32 %v925, %v872
        %928 = vrot.lane.b32.xlu0 %v926, 119
        %v929 = vpop.permute.xlu0 %928
        %v930 = vrot.slane %v929, 1
        %vm931 = vcmask 973824
        %v932 = vsel %vm931, %v929, %v930
        %v934 = vadd.f32 %v923, %v932
        %s935 = sld [smem:[#allocation3 + $0x30]]
        %v936 = vstv %s935
        %v937 = vmul.f32 %v936, %v872
        %939 = vrot.lane.b32.xlu0 %v937, 118
        %v940 = vpop.permute.xlu0 %939
        %v941 = vrot.slane %v940, 1
        %vm942 = vcmask 965632
        %v943 = vsel %vm942, %v940, %v941
        %v945 = vadd.f32 %v934, %v943
        %s946 = sld [smem:[#allocation3 + $0x31]]
        %s947 = scalar_lea.vmem [#allocation2], 1
        %v948 = vld [vmem:[%s947] ss:$2 sm:$0x7]
        %v949 = vstv %s946
        %v950 = vmul.f32 %v949, %v948
        %v951 = vadd.f32 %v945, %v950
        %s952 = sld [smem:[#allocation3 + $0x32]]
        %v953 = vstv %s952
        %v954 = vmul.f32 %v953, %v948
        %956 = vrot.lane.b32.xlu0 %v954, 127
        %v957 = vpop.permute.xlu0 %956
        %v958 = vrot.slane %v957, 1
        %v959 = vsel %vm426, %v957, %v958
        %v961 = vadd.f32 %v951, %v959
        %s962 = sld [smem:[#allocation3 + $0x33]]
        %v963 = vstv %s962
        %v964 = vmul.f32 %v963, %v948
        %966 = vrot.lane.b32.xlu0 %v964, 126
        %v967 = vpop.permute.xlu0 %966
        %v968 = vrot.slane %v967, 1
        %v969 = vsel %vm437, %v967, %v968
        %v971 = vadd.f32 %v961, %v969
        %s972 = sld [smem:[#allocation3 + $0x34]]
        %v973 = vstv %s972
        %v974 = vmul.f32 %v973, %v948
        %976 = vrot.lane.b32.xlu0 %v974, 125
        %v977 = vpop.permute.xlu0 %976
        %v978 = vrot.slane %v977, 1
        %v979 = vsel %vm448, %v977, %v978
        %v981 = vadd.f32 %v971, %v979
        %s982 = sld [smem:[#allocation3 + $0x35]]
        %v983 = vstv %s982
        %v984 = vmul.f32 %v983, %v948
        %986 = vrot.lane.b32.xlu0 %v984, 124
        %v987 = vpop.permute.xlu0 %986
        %v988 = vrot.slane %v987, 1
        %v989 = vsel %vm459, %v987, %v988
        %v991 = vadd.f32 %v981, %v989
        %s992 = sld [smem:[#allocation3 + $0x36]]
        %v993 = vstv %s992
        %v994 = vmul.f32 %v993, %v948
        %996 = vrot.lane.b32.xlu0 %v994, 123
        %v997 = vpop.permute.xlu0 %996
        %v998 = vrot.slane %v997, 1
        %v999 = vsel %vm470, %v997, %v998
        %v1001 = vadd.f32 %v991, %v999
        %s1002 = sld [smem:[#allocation3 + $0x37]]
        %v1003 = vstv %s1002
        %v1004 = vmul.f32 %v1003, %v948
        %1006 = vrot.lane.b32.xlu0 %v1004, 122
        %v1007 = vpop.permute.xlu0 %1006
        %v1008 = vrot.slane %v1007, 1
        %v1009 = vsel %vm481, %v1007, %v1008
        %v1011 = vadd.f32 %v1001, %v1009
        %s1012 = sld [smem:[#allocation3 + $0x38]]
        %v1013 = vstv %s1012
        %v1014 = vmul.f32 %v1013, %v948
        %1016 = vrot.lane.b32.xlu0 %v1014, 106
        %v1017 = vpop.permute.xlu0 %1016
        %v1018 = vrot.slane %v1017, 1
        %v1019 = vsel %vm492, %v1017, %v1018
        %v1021 = vadd.f32 %v1011, %v1019
        %s1022 = sld [smem:[#allocation3 + $0x39]]
        %v1023 = vstv %s1022
        %v1024 = vmul.f32 %v1023, %v948
        %1026 = vrot.lane.b32.xlu0 %v1024, 105
        %v1027 = vpop.permute.xlu0 %1026
        %v1028 = vrot.slane %v1027, 1
        %v1029 = vsel %vm503, %v1027, %v1028
        %v1031 = vadd.f32 %v1021, %v1029
        %s1032 = sld [smem:[#allocation3 + $0x3a]]
        %v1033 = vstv %s1032
        %v1034 = vmul.f32 %v1033, %v948
        %1036 = vrot.lane.b32.xlu0 %v1034, 104
        %v1037 = vpop.permute.xlu0 %1036
        %v1038 = vrot.slane %v1037, 1
        %v1039 = vsel %vm514, %v1037, %v1038
        %v1041 = vadd.f32 %v1031, %v1039
        %s1042 = sld [smem:[#allocation3 + $0x3b]]
        %v1043 = vstv %s1042
        %v1044 = vmul.f32 %v1043, %v948
        %1046 = vrot.lane.b32.xlu0 %v1044, 103
        %v1047 = vpop.permute.xlu0 %1046
        %v1048 = vrot.slane %v1047, 1
        %v1049 = vsel %vm525, %v1047, %v1048
        %v1051 = vadd.f32 %v1041, %v1049
        %s1052 = sld [smem:[#allocation3 + $0x3c]]
        %v1053 = vstv %s1052
        %v1054 = vmul.f32 %v1053, %v948
        %1056 = vrot.lane.b32.xlu0 %v1054, 102
        %v1057 = vpop.permute.xlu0 %1056
        %v1058 = vrot.slane %v1057, 1
        %v1059 = vsel %vm536, %v1057, %v1058
        %v1061 = vadd.f32 %v1051, %v1059
        %s1062 = sld [smem:[#allocation3 + $0x3d]]
        %v1063 = vstv %s1062
        %v1064 = vmul.f32 %v1063, %v948
        %1066 = vrot.lane.b32.xlu0 %v1064, 101
        %v1067 = vpop.permute.xlu0 %1066
        %v1068 = vrot.slane %v1067, 1
        %v1069 = vsel %vm547, %v1067, %v1068
        %v1071 = vadd.f32 %v1061, %v1069
        %s1072 = sld [smem:[#allocation3 + $0x3e]]
        %v1073 = vstv %s1072
        %v1074 = vmul.f32 %v1073, %v948
        %1076 = vrot.lane.b32.xlu0 %v1074, 100
        %v1077 = vpop.permute.xlu0 %1076
        %v1078 = vrot.slane %v1077, 1
        %v1079 = vsel %vm558, %v1077, %v1078
        %v1081 = vadd.f32 %v1071, %v1079
        %s1082 = sld [smem:[#allocation3 + $0x3f]]
        %v1083 = vld [vmem:[%s947] ss:$2 sm:$0xf]
        %v1084 = vstv %s1082
        %v1085 = vmul.f32 %v1084, %v1083
        %1087 = vrot.lane.b32.xlu0 %v1085, 84
        %v1088 = vpop.permute.xlu0 %1087
        %v1089 = vrot.slane %v1088, 1
        %v1090 = vsel %vm570, %v1088, %v1089
        %v1092 = vadd.f32 %v1081, %v1090
        %s1093 = sld [smem:[#allocation3 + $0x40]]
        %v1094 = vstv %s1093
        %v1095 = vmul.f32 %v1094, %v1083
        %1097 = vrot.lane.b32.xlu0 %v1095, 83
        %v1098 = vpop.permute.xlu0 %1097
        %v1099 = vrot.slane %v1098, 1
        %v1100 = vsel %vm581, %v1098, %v1099
        %v1102 = vadd.f32 %v1092, %v1100
        %s1103 = sld [smem:[#allocation3 + $0x41]]
        %v1104 = vstv %s1103
        %v1105 = vmul.f32 %v1104, %v1083
        %1107 = vrot.lane.b32.xlu0 %v1105, 82
        %v1108 = vpop.permute.xlu0 %1107
        %v1109 = vrot.slane %v1108, 1
        %v1110 = vsel %vm592, %v1108, %v1109
        %v1112 = vadd.f32 %v1102, %v1110
        %s1113 = sld [smem:[#allocation3 + $0x42]]
        %v1114 = vstv %s1113
        %v1115 = vmul.f32 %v1114, %v1083
        %1117 = vrot.lane.b32.xlu0 %v1115, 81
        %v1118 = vpop.permute.xlu0 %1117
        %v1119 = vrot.slane %v1118, 1
        %v1120 = vsel %vm254, %v1118, %v1119
        %v1122 = vadd.f32 %v1112, %v1120
        %s1123 = sld [smem:[#allocation3 + $0x43]]
        %v1124 = vstv %s1123
        %v1125 = vmul.f32 %v1124, %v1083
        %1127 = vrot.lane.b32.xlu0 %v1125, 80
        %v1128 = vpop.permute.xlu0 %1127
        %v1129 = vrot.slane %v1128, 1
        %v1130 = vsel %vm613, %v1128, %v1129
        %v1132 = vadd.f32 %v1122, %v1130
        %s1133 = sld [smem:[#allocation3 + $0x44]]
        %v1134 = vstv %s1133
        %v1135 = vmul.f32 %v1134, %v1083
        %1137 = vrot.lane.b32.xlu0 %v1135, 79
        %v1138 = vpop.permute.xlu0 %1137
        %v1139 = vrot.slane %v1138, 1
        %v1140 = vsel %vm624, %v1138, %v1139
        %v1142 = vadd.f32 %v1132, %v1140
        %s1143 = sld [smem:[#allocation3 + $0x45]]
        %v1144 = vstv %s1143
        %v1145 = vmul.f32 %v1144, %v1083
        %1147 = vrot.lane.b32.xlu0 %v1145, 78
        %v1148 = vpop.permute.xlu0 %1147
        %v1149 = vrot.slane %v1148, 1
        %v1150 = vsel %vm635, %v1148, %v1149
        %v1152 = vadd.f32 %v1142, %v1150
        %s1153 = sld [smem:[#allocation3 + $0x46]]
        %v1154 = vstv %s1153
        %v1155 = vmul.f32 %v1154, %v1083
        %1157 = vrot.lane.b32.xlu0 %v1155, 62
        %v1158 = vpop.permute.xlu0 %1157
        %v1159 = vrot.slane %v1158, 1
        %v1160 = vsel %vm646, %v1158, %v1159
        %v1162 = vadd.f32 %v1152, %v1160
        %s1163 = sld [smem:[#allocation3 + $0x47]]
        %v1164 = vstv %s1163
        %v1165 = vmul.f32 %v1164, %v1083
        %1167 = vrot.lane.b32.xlu0 %v1165, 61
        %v1168 = vpop.permute.xlu0 %1167
        %v1169 = vrot.slane %v1168, 1
        %v1170 = vsel %vm657, %v1168, %v1169
        %v1172 = vadd.f32 %v1162, %v1170
        %s1173 = sld [smem:[#allocation3 + $0x48]]
        %v1174 = vstv %s1173
        %v1175 = vmul.f32 %v1174, %v1083
        %1177 = vrot.lane.b32.xlu0 %v1175, 60
        %v1178 = vpop.permute.xlu0 %1177
        %v1179 = vrot.slane %v1178, 1
        %v1180 = vsel %vm668, %v1178, %v1179
        %v1182 = vadd.f32 %v1172, %v1180
        %s1183 = sld [smem:[#allocation3 + $0x49]]
        %v1184 = vstv %s1183
        %v1185 = vmul.f32 %v1184, %v1083
        %1187 = vrot.lane.b32.xlu0 %v1185, 59
        %v1188 = vpop.permute.xlu0 %1187
        %v1189 = vrot.slane %v1188, 1
        %v1190 = vsel %vm679, %v1188, %v1189
        %v1192 = vadd.f32 %v1182, %v1190
        %s1193 = sld [smem:[#allocation3 + $0x4a]]
        %v1194 = vstv %s1193
        %v1195 = vmul.f32 %v1194, %v1083
        %1197 = vrot.lane.b32.xlu0 %v1195, 58
        %v1198 = vpop.permute.xlu0 %1197
        %v1199 = vrot.slane %v1198, 1
        %v1200 = vsel %vm690, %v1198, %v1199
        %v1202 = vadd.f32 %v1192, %v1200
        %s1203 = sld [smem:[#allocation3 + $0x4b]]
        %v1204 = vstv %s1203
        %v1205 = vmul.f32 %v1204, %v1083
        %1207 = vrot.lane.b32.xlu0 %v1205, 57
        %v1208 = vpop.permute.xlu0 %1207
        %v1209 = vrot.slane %v1208, 1
        %v1210 = vsel %vm701, %v1208, %v1209
        %v1212 = vadd.f32 %v1202, %v1210
        %s1213 = sld [smem:[#allocation3 + $0x4c]]
        %v1214 = vstv %s1213
        %v1215 = vmul.f32 %v1214, %v1083
        %1217 = vrot.lane.b32.xlu0 %v1215, 56
        %v1218 = vpop.permute.xlu0 %1217
        %v1219 = vrot.slane %v1218, 1
        %v1220 = vsel %vm712, %v1218, %v1219
        %v1222 = vadd.f32 %v1212, %v1220
        %s1223 = sld [smem:[#allocation3 + $0x4d]]
        %v1224 = vstv %s1223
        %v1225 = vmul.f32 %v1224, %v1083
        %1227 = vrot.lane.b32.xlu0 %v1225, 40
        %v1228 = vpop.permute.xlu0 %1227
        %v1229 = vrot.slane %v1228, 1
        %v1230 = vsel %vm723, %v1228, %v1229
        %v1232 = vadd.f32 %v1222, %v1230
        %s1233 = sld [smem:[#allocation3 + $0x4e]]
        %v1234 = vstv %s1233
        %v1235 = vmul.f32 %v1234, %v1083
        %1237 = vrot.lane.b32.xlu0 %v1235, 39
        %v1238 = vpop.permute.xlu0 %1237
        %v1239 = vrot.slane %v1238, 1
        %v1240 = vsel %vm734, %v1238, %v1239
        %v1242 = vadd.f32 %v1232, %v1240
        %s1243 = sld [smem:[#allocation3 + $0x4f]]
        %v1244 = vstv %s1243
        %v1245 = vmul.f32 %v1244, %v1083
        %1247 = vrot.lane.b32.xlu0 %v1245, 38
        %v1248 = vpop.permute.xlu0 %1247
        %v1249 = vrot.slane %v1248, 1
        %v1250 = vsel %vm745, %v1248, %v1249
        %v1252 = vadd.f32 %v1242, %v1250
        %s1253 = sld [smem:[#allocation3 + $0x50]]
        %v1254 = vstv %s1253
        %v1255 = vmul.f32 %v1254, %v1083
        %1257 = vrot.lane.b32.xlu0 %v1255, 37
        %v1258 = vpop.permute.xlu0 %1257
        %v1259 = vrot.slane %v1258, 1
        %v1260 = vsel %vm756, %v1258, %v1259
        %v1262 = vadd.f32 %v1252, %v1260
        %s1263 = sld [smem:[#allocation3 + $0x51]]
        %v1264 = vstv %s1263
        %v1265 = vmul.f32 %v1264, %v1083
        %1267 = vrot.lane.b32.xlu0 %v1265, 36
        %v1268 = vpop.permute.xlu0 %1267
        %v1269 = vrot.slane %v1268, 1
        %v1270 = vsel %vm767, %v1268, %v1269
        %v1272 = vadd.f32 %v1262, %v1270
        %s1273 = sld [smem:[#allocation3 + $0x52]]
        %v1274 = vstv %s1273
        %v1275 = vmul.f32 %v1274, %v1083
        %1277 = vrot.lane.b32.xlu0 %v1275, 35
        %v1278 = vpop.permute.xlu0 %1277
        %v1279 = vrot.slane %v1278, 1
        %v1280 = vsel %vm778, %v1278, %v1279
        %v1282 = vadd.f32 %v1272, %v1280
        %s1283 = sld [smem:[#allocation3 + $0x53]]
        %v1284 = vstv %s1283
        %v1285 = vmul.f32 %v1284, %v1083
        %1287 = vrot.lane.b32.xlu0 %v1285, 34
        %v1288 = vpop.permute.xlu0 %1287
        %v1289 = vrot.slane %v1288, 1
        %v1290 = vsel %vm789, %v1288, %v1289
        %v1292 = vadd.f32 %v1282, %v1290
        %s1293 = sld [smem:[#allocation3 + $0x54]]
        %v1294 = vstv %s1293
        %v1295 = vmul.f32 %v1294, %v1083
        %1297 = vrot.lane.b32.xlu0 %v1295, 18
        %v1298 = vpop.permute.xlu0 %1297
        %v1299 = vrot.slane %v1298, 1
        %v1300 = vsel %vm800, %v1298, %v1299
        %v1302 = vadd.f32 %v1292, %v1300
        %s1303 = sld [smem:[#allocation3 + $0x55]]
        %v1304 = vstv %s1303
        %v1305 = vmul.f32 %v1304, %v1083
        %1307 = vrot.lane.b32.xlu0 %v1305, 17
        %v1308 = vpop.permute.xlu0 %1307
        %v1309 = vrot.slane %v1308, 1
        %v1310 = vsel %vm811, %v1308, %v1309
        %v1312 = vadd.f32 %v1302, %v1310
        %s1313 = sld [smem:[#allocation3 + $0x56]]
        %v1314 = vstv %s1313
        %v1315 = vmul.f32 %v1314, %v1083
        %1317 = vrot.lane.b32.xlu0 %v1315, 16
        %v1318 = vpop.permute.xlu0 %1317
        %v1319 = vrot.slane %v1318, 1
        %v1320 = vsel %vm822, %v1318, %v1319
        %v1322 = vadd.f32 %v1312, %v1320
        %s1323 = sld [smem:[#allocation3 + $0x57]]
        %v1324 = vstv %s1323
        %v1325 = vmul.f32 %v1324, %v1083
        %1327 = vrot.lane.b32.xlu0 %v1325, 15
        %v1328 = vpop.permute.xlu0 %1327
        %v1329 = vrot.slane %v1328, 1
        %v1330 = vsel %vm833, %v1328, %v1329
        %v1332 = vadd.f32 %v1322, %v1330
        %s1333 = sld [smem:[#allocation3 + $0x58]]
        %v1334 = vstv %s1333
        %v1335 = vmul.f32 %v1334, %v1083
        %1337 = vrot.lane.b32.xlu0 %v1335, 14
        %v1338 = vpop.permute.xlu0 %1337
        %v1339 = vrot.slane %v1338, 1
        %v1340 = vsel %vm844, %v1338, %v1339
        %v1342 = vadd.f32 %v1332, %v1340
        %s1343 = sld [smem:[#allocation3 + $0x59]]
        %v1344 = vstv %s1343
        %v1345 = vmul.f32 %v1344, %v1083
        %1347 = vrot.lane.b32.xlu0 %v1345, 13
        %v1348 = vpop.permute.xlu0 %1347
        %v1349 = vrot.slane %v1348, 1
        %v1350 = vsel %vm855, %v1348, %v1349
        %v1352 = vadd.f32 %v1342, %v1350
        %s1353 = sld [smem:[#allocation3 + $0x5a]]
        %v1354 = vstv %s1353
        %v1355 = vmul.f32 %v1354, %v1083
        %1357 = vrot.lane.b32.xlu0 %v1355, 12
        %v1358 = vpop.permute.xlu0 %1357
        %v1359 = vrot.slane %v1358, 1
        %v1360 = vsel %vm866, %v1358, %v1359
        %v1362 = vadd.f32 %v1352, %v1360
        %s1363 = sld [smem:[#allocation3 + $0x5b]]
        %s1364 = scalar_lea.vmem [#allocation2], 3
        %v1365 = vld [vmem:[%s1364] ss:$2 sm:$0x7]
        %v1366 = vstv %s1363
        %v1367 = vmul.f32 %v1366, %v1365
        %1369 = vrot.lane.b32.xlu0 %v1367, 124
        %v1370 = vpop.permute.xlu0 %1369
        %v1371 = vrot.slane %v1370, 1
        %v1372 = vsel %vm459, %v1370, %v1371
        %v1374 = vadd.f32 %v1362, %v1372
        %s1375 = sld [smem:[#allocation3 + $0x5c]]
        %v1376 = vstv %s1375
        %v1377 = vmul.f32 %v1376, %v1365
        %1379 = vrot.lane.b32.xlu0 %v1377, 123
        %v1380 = vpop.permute.xlu0 %1379
        %v1381 = vrot.slane %v1380, 1
        %v1382 = vsel %vm470, %v1380, %v1381
        %v1384 = vadd.f32 %v1374, %v1382
        %s1385 = sld [smem:[#allocation3 + $0x5d]]
        %v1386 = vstv %s1385
        %v1387 = vmul.f32 %v1386, %v1365
        %1389 = vrot.lane.b32.xlu0 %v1387, 122
        %v1390 = vpop.permute.xlu0 %1389
        %v1391 = vrot.slane %v1390, 1
        %v1392 = vsel %vm481, %v1390, %v1391
        %v1394 = vadd.f32 %v1384, %v1392
        %s1395 = sld [smem:[#allocation3 + $0x5e]]
        %v1396 = vstv %s1395
        %v1397 = vmul.f32 %v1396, %v1365
        %1399 = vrot.lane.b32.xlu0 %v1397, 121
        %v1400 = vpop.permute.xlu0 %1399
        %v1401 = vrot.slane %v1400, 1
        %v1402 = vsel %vm909, %v1400, %v1401
        %v1404 = vadd.f32 %v1394, %v1402
        %s1405 = sld [smem:[#allocation3 + $0x5f]]
        %v1406 = vstv %s1405
        %v1407 = vmul.f32 %v1406, %v1365
        %1409 = vrot.lane.b32.xlu0 %v1407, 120
        %v1410 = vpop.permute.xlu0 %1409
        %v1411 = vrot.slane %v1410, 1
        %v1412 = vsel %vm920, %v1410, %v1411
        %v1414 = vadd.f32 %v1404, %v1412
        %s1415 = sld [smem:[#allocation3 + $0x60]]
        %v1416 = vstv %s1415
        %v1417 = vmul.f32 %v1416, %v1365
        %1419 = vrot.lane.b32.xlu0 %v1417, 119
        %v1420 = vpop.permute.xlu0 %1419
        %v1421 = vrot.slane %v1420, 1
        %v1422 = vsel %vm931, %v1420, %v1421
        %v1424 = vadd.f32 %v1414, %v1422
        %s1425 = sld [smem:[#allocation3 + $0x61]]
        %v1426 = vstv %s1425
        %v1427 = vmul.f32 %v1426, %v1365
        %1429 = vrot.lane.b32.xlu0 %v1427, 118
        %v1430 = vpop.permute.xlu0 %1429
        %v1431 = vrot.slane %v1430, 1
        %v1432 = vsel %vm942, %v1430, %v1431
        %v1434 = vadd.f32 %v1424, %v1432
        %v1435 = vxor.u32 %v1434, 2147483648
        %v1436 = vmul.f32 %v1435, 1.442695
        %v1437 = vpow.pop %v1436
        %v1438 = vadd.f32 %v1437, 1.0
        %v1439 = vrcp.pop %v1438
        %v1440 = vmul.f32 1.0, %v1439
        %v1441 = vlaneseq
        %vm1442 = vcmp.ge.s32.totalorder %v1441, 0
        %vm1443 = vcmp.lt.s32.totalorder %v1441, 352
        %vm1444 = vmand %vm1442, %vm1443
        %1445 = vst.msk [vmem:[%s171] sm:$0x7] %vm1444, %v1440
        %s1446 = sand.u32 %s75, 1
        %s1447 = scalar_lea.sflag [#allocation5], %s1446
        %s1448 = sand.u32 %s75, 1
        %s1449 = smul.addr %s1448, 3
        %s1450 = scalar_lea.vmem [#allocation8], %s1449
        // Predicated region
        $region37: #{tpu_custom_call.1} parent=27 // pred_check
          %p1451 = pneg %p85
        $region38: #{tpu_custom_call.1} parent=27 // pred_check_branch
          %1453 = sbr.rel (%p1451) target = $region40
        $region39: #{tpu_custom_call.1} parent=27 // pred_region
          %s1455 = ssub.s32 48, 48
          %1456 = vsyncadd %s1447, %s1455
          %s1457 = smul.addr %s20, 3
          %s1458 = smul.addr %s1457, 16
          %s1459 = scalar_lea.hbm %s2, %s1458
          %s1461 = sshll.u32 %s1450, 4
          %s1462 = int_to_ptr.vmem [resolvable:$true] %s1461
          %1464 = dma.vmem_to_hbm [thread:$0]  %s1462, 48, %s1459, %s1447
        $region40: #{tpu_custom_call.1} parent=27 // pred_fallthru
          _
      $region28: #{tpu_custom_call.1} parent=5 // pred_fallthru
        _
      %p1465 = scmp.le.s32.totalorder 2, %s15
      // Predicated region
      $region41: #{tpu_custom_call.1} parent=5 // pred_check
        %p1466 = pneg %p1465
      $region42: #{tpu_custom_call.1} parent=5 // pred_check_branch
        %1468 = sbr.rel (%p1466) target = $region44
      $region43: #{tpu_custom_call.1} parent=5 // pred_region
        %s1469 = ssub.s32 %s15, 2
        // Predicated region
        $region45: #{tpu_custom_call.1} parent=43 // pred_check
          %p1470 = pneg %p91
        $region46: #{tpu_custom_call.1} parent=43 // pred_check_branch
          %1472 = sbr.rel (%p1470) target = $region48
        $region47: #{tpu_custom_call.1} parent=43 // pred_region
          %s1473 = sand.u32 %s76, 1
          %s1474 = scalar_lea.sflag [#allocation5], %s1473
          %s1475 = sand.u32 %s76, 1
          %s1476 = smul.addr %s1475, 3
          %s1477 = scalar_lea.vmem [#allocation8], %s1476
          %1478 = dma.done %s1474, 48
        $region48: #{tpu_custom_call.1} parent=43 // pred_fallthru
          _
      $region44: #{tpu_custom_call.1} parent=5 // pred_fallthru
        _
    $region6: #{tpu_custom_call.1} parent=1 // loop_footer
      %s19 = sadd.s32 1, %s15
    $region7: #{tpu_custom_call.1} parent=1 // loop_footer_branch
      %14 = sbr.rel target = $region3
    $region8: #{tpu_custom_call.1} parent=1 // loop_exit
      _
    %1479 = vsyncpa [#allocation4], 1
    %s1480 = scalar_lea.sflag [#allocation4], 1
    %1481 = vsyncpa %s1480, 1
    %1482 = vsyncpa [#allocation5], 1
    %s1483 = scalar_lea.sflag [#allocation5], 1
    %1484 = vsyncpa %s1483, 1
    %1485 = vsyncpa [#allocation6], 1
    %s1486 = scalar_lea.sflag [#allocation6], 1
    %1487 = vsyncpa %s1486, 1

</llo_original>
